<compile_context>
chip_gen: v5e
topology: v5e:2x2
jax: 0.10.0
libtpu: 0.0.40
codegen_flags: <defaults>
</compile_context>

<pallas_src>
import functools

import jax
import jax.numpy as jnp
from jax import lax
from jax.experimental import pallas as pl
from jax.experimental.pallas import tpu as pltpu


def _round_up(x, m):
    return (x + m - 1) // m * m


# ----------------------------------------------------------------------------
# In-kernel helper (traced inside the Pallas body)
# ----------------------------------------------------------------------------
def _shift_lanes(x, delta, n):
    """Circular shift along the last (lane) axis: out[:, o] = x[:, (o+delta) % n].

    `delta` is a Python int, so this lowers to two static lane slices + one
    lane concat (pure lane-axis data movement, proven to lower on Mosaic).
    TODO(synk): could become a single pltpu.roll (XLU slot) once the rotation
    sign is verified on hardware.
    """
    d = delta % n
    if d == 0:
        return x
    return jnp.concatenate([x[:, d:], x[:, :d]], axis=1)


# ----------------------------------------------------------------------------
# Wrapper-side constant builders (hoisted OUT of the kernel per perf review)
# ----------------------------------------------------------------------------
def _boundary_masks(H, W, KH, KW, pad):
    """(KK, H*W) f32 0/1 planes: validity of each conv tap at each output pixel."""
    pos = jnp.arange(H * W, dtype=jnp.int32)
    row, col = pos // W, pos % W
    masks = []
    for kh in range(KH):
        for kw in range(KW):
            dh, dw = kh - pad, kw - pad
            valid = ((row + dh >= 0) & (row + dh < H)
                     & (col + dw >= 0) & (col + dw < W))
            masks.append(valid)
    return jnp.stack(masks, axis=0).astype(jnp.float32)


def _resample_matrix(H, W, Hl, Wl, transposed, value):
    """0/value bf16 matrix linking each high-res flat pixel to its 2x2 low cell.

    transposed=False -> (H*W, Hl*Wl)  right operand of the avg-pool matmul
    transposed=True  -> (Hl*Wl, H*W)  right operand of the nearest-upsample matmul
    """
    hr = jnp.arange(H * W, dtype=jnp.int32)
    lr = jnp.arange(Hl * Wl, dtype=jnp.int32)
    hit = ((((hr[:, None] // W) // 2) == (lr[None, :] // Wl))
           & (((hr[:, None] % W) // 2) == (lr[None, :] % Wl)))   # (HW, HWl)
    m = jnp.where(hit, jnp.float32(value), jnp.float32(0.0)).astype(jnp.bfloat16)
    return m.T if transposed else m


# ----------------------------------------------------------------------------
# Pallas kernel 1: fused octave conv (all 4 paths, pool, upsample, adds)
# plus per-sample per-channel sum / sum-of-squares for BatchNorm.
# Grid: one batch element per step ("parallel").
# ----------------------------------------------------------------------------
def _oct_conv_kernel(xh_ref, xl_ref, whh_ref, wlow_ref, whl_ref,
                     mh_ref, ml_ref, pool_ref, up_ref,
                     pre_h_ref, pre_l_ref, sth_ref, stl_ref,
                     *, H, W, KH, KW, pad, c_out_h):
    HW = H * W
    Hl, Wl = H // 2, W // 2
    HWl = Hl * Wl

    xh = xh_ref[0]               # (Cin_h_pad, HW)   f32
    xl = xl_ref[0]               # (Cin_l_pad, HWl)  f32
    mask_h = mh_ref[...]         # (KK, HW)  f32 0/1
    mask_l = ml_ref[...]         # (KK, HWl) f32 0/1

    def stacked_taps(x, mask, Wx, HWx):
        """(KK*Cin_pad, HWx) bf16 stack of shifted+masked tap copies of x."""
        taps = []
        for kh in range(KH):
            for kw in range(KW):
                dh, dw = kh - pad, kw - pad
                t = kh * KW + kw
                s = _shift_lanes(x, dh * Wx + dw, HWx)
                if dh != 0 or dw != 0:
                    s = s * mask[t:t + 1, :]
                taps.append(s)
        # Cin is padded to a multiple of 8 in the wrapper, so this sublane
        # concat is tile-aligned; one cast to bf16 for the MXU.
        return jnp.concatenate(taps, axis=0).astype(jnp.bfloat16)

    # ---------------- high-frequency output branch ----------------
    y_hh = jnp.dot(whh_ref[...], stacked_taps(xh, mask_h, W, HW),
                   preferred_element_type=jnp.float32)           # (Ch, HW)
    y_low = jnp.dot(wlow_ref[...], stacked_taps(xl, mask_l, Wl, HWl),
                    preferred_element_type=jnp.float32)          # (Ch+Cl, HWl)
    y_lh = y_low[:c_out_h]                                       # low-in -> high-out
    y_ll = y_low[c_out_h:]                                       # low-in -> low-out

    # nearest 2x upsample of y_lh as a 0/1 matmul (keeps result lane-dense)
    y_lh_up = jnp.dot(y_lh.astype(jnp.bfloat16), up_ref[...],
                      preferred_element_type=jnp.float32)        # (Ch, HW)

    pre_h = y_hh + y_lh_up                                       # f32
    pre_h_ref[0] = pre_h.astype(jnp.bfloat16)
    sth_ref[0] = jnp.concatenate(
        [jnp.sum(pre_h, axis=1, keepdims=True),
         jnp.sum(pre_h * pre_h, axis=1, keepdims=True)], axis=1)

    # ---------------- low-frequency output branch ----------------
    # 2x2 average pool of x_h as a 0/0.25 matmul
    xh_pool = jnp.dot(xh.astype(jnp.bfloat16), pool_ref[...],
                      preferred_element_type=jnp.float32)        # (Cin_h_pad, HWl)
    y_hl = jnp.dot(whl_ref[...], stacked_taps(xh_pool, mask_l, Wl, HWl),
                   preferred_element_type=jnp.float32)           # (Cl, HWl)

    pre_l = y_hl + y_ll                                          # f32
    pre_l_ref[0] = pre_l.astype(jnp.bfloat16)
    stl_ref[0] = jnp.concatenate(
        [jnp.sum(pre_l, axis=1, keepdims=True),
         jnp.sum(pre_l * pre_l, axis=1, keepdims=True)], axis=1)


# ----------------------------------------------------------------------------
# Pallas kernel 2: pure-affine BatchNorm apply (scale/shift precomputed from
# the accumulated statistics).  Reads bf16 pre-activations, writes f32.
# ----------------------------------------------------------------------------
def _bn_affine_kernel(pre_h_ref, pre_l_ref, sc_h_ref, sh_h_ref,
                      sc_l_ref, sh_l_ref, y_h_ref, y_l_ref):
    y_h_ref[0] = pre_h_ref[0].astype(jnp.float32) * sc_h_ref[...] + sh_h_ref[...]
    y_l_ref[0] = pre_l_ref[0].astype(jnp.float32) * sc_l_ref[...] + sh_l_ref[...]


# ----------------------------------------------------------------------------
# OctConvBn forward
# ----------------------------------------------------------------------------
def oct_conv_bn(x_h, x_l, weight, gamma_h, beta_h, gamma_l, beta_l,
                *, padding, eps=1e-5):
    """x_h: (N, Cin_h, H, W); x_l: (N, Cin_l, H/2, W/2); weight: OIHW.
    Returns (y_h, y_l) in NCHW."""
    N, c_in_h, H, W = x_h.shape
    _, c_in_l, Hl, Wl = x_l.shape
    c_out_h = gamma_h.shape[0]
    c_out_l = gamma_l.shape[0]
    KH, KW = weight.shape[2], weight.shape[3]
    KK = KH * KW
    HW, HWl = H * W, Hl * Wl

    # Pad input-channel counts to a multiple of 8 so the in-kernel tap stack
    # (a sublane concat) is tile-aligned.  Zero channels contribute nothing.
    ci_h_p = _round_up(c_in_h, 8)
    ci_l_p = _round_up(c_in_l, 8)

    # OIHW (Co,Ci,KH,KW) -> bf16 (Co, KK*Ci_pad), column order (kh, kw, ci)
    # (matches the row order of the in-kernel tap stack).  Cast once here.
    def to_cat(w, ci_p):
        co, ci = w.shape[0], w.shape[1]
        w = jnp.pad(w, ((0, 0), (0, ci_p - ci), (0, 0), (0, 0)))
        return jnp.transpose(w, (0, 2, 3, 1)).reshape(co, KK * ci_p).astype(jnp.bfloat16)

    w_hh = to_cat(weight[:c_out_h, :c_in_h], ci_h_p)     # high-in -> high-out
    w_low = to_cat(weight[:, c_in_h:], ci_l_p)           # low-in  -> (high|low)-out
    w_hl = to_cat(weight[c_out_h:, :c_in_h], ci_h_p)     # high-in -> low-out

    # Hoisted constants (DMA'd once thanks to constant index_maps).
    mask_h = _boundary_masks(H, W, KH, KW, padding)
    mask_l = _boundary_masks(Hl, Wl, KH, KW, padding)
    pool_mat = _resample_matrix(H, W, Hl, Wl, transposed=False, value=0.25)
    up_mat = _resample_matrix(H, W, Hl, Wl, transposed=True, value=1.0)

    # Flatten spatial onto the lane axis (free reshape) + zero-pad channels.
    xh_f = jnp.pad(x_h.reshape(N, c_in_h, HW),
                   ((0, 0), (0, ci_h_p - c_in_h), (0, 0)))
    xl_f = jnp.pad(x_l.reshape(N, c_in_l, HWl),
                   ((0, 0), (0, ci_l_p - c_in_l), (0, 0)))

    conv_kernel = functools.partial(
        _oct_conv_kernel, H=H, W=W, KH=KH, KW=KW, pad=padding, c_out_h=c_out_h)

    flops_conv = int(2 * N * (KK * ci_h_p * c_out_h * HW
                              + KK * ci_l_p * (c_out_h + c_out_l) * HWl
                              + KK * ci_h_p * c_out_l * HWl
                              + c_out_h * HWl * HW          # upsample matmul
                              + ci_h_p * HW * HWl))         # pool matmul
    bytes_conv = int(N * (ci_h_p * HW + ci_l_p * HWl) * 4
                     + (c_out_h * KK * ci_h_p + (c_out_h + c_out_l) * KK * ci_l_p
                        + c_out_l * KK * ci_h_p) * 2
                     + KK * (HW + HWl) * 4 + 2 * HW * HWl * 2
                     + N * (c_out_h * HW + c_out_l * HWl) * 2
                     + N * (c_out_h + c_out_l) * 2 * 4)

    pre_h, pre_l, st_h, st_l = pl.pallas_call(
        conv_kernel,
        out_shape=(
            jax.ShapeDtypeStruct((N, c_out_h, HW), jnp.bfloat16),
            jax.ShapeDtypeStruct((N, c_out_l, HWl), jnp.bfloat16),
            jax.ShapeDtypeStruct((N, c_out_h, 2), jnp.float32),
            jax.ShapeDtypeStruct((N, c_out_l, 2), jnp.float32),
        ),
        grid=(N,),
        in_specs=[
            pl.BlockSpec((1, ci_h_p, HW), lambda n: (n, 0, 0)),
            pl.BlockSpec((1, ci_l_p, HWl), lambda n: (n, 0, 0)),
            pl.BlockSpec((c_out_h, KK * ci_h_p), lambda n: (0, 0)),
            pl.BlockSpec((c_out_h + c_out_l, KK * ci_l_p), lambda n: (0, 0)),
            pl.BlockSpec((c_out_l, KK * ci_h_p), lambda n: (0, 0)),
            pl.BlockSpec((KK, HW), lambda n: (0, 0)),
            pl.BlockSpec((KK, HWl), lambda n: (0, 0)),
            pl.BlockSpec((HW, HWl), lambda n: (0, 0)),
            pl.BlockSpec((HWl, HW), lambda n: (0, 0)),
        ],
        out_specs=(
            pl.BlockSpec((1, c_out_h, HW), lambda n: (n, 0, 0)),
            pl.BlockSpec((1, c_out_l, HWl), lambda n: (n, 0, 0)),
            pl.BlockSpec((1, c_out_h, 2), lambda n: (n, 0, 0)),
            pl.BlockSpec((1, c_out_l, 2), lambda n: (n, 0, 0)),
        ),
        compiler_params=pltpu.CompilerParams(
            dimension_semantics=("parallel",),
            vmem_limit_bytes=64 * 1024 * 1024),
        cost_estimate=pl.CostEstimate(flops=flops_conv, transcendentals=0,
                                      bytes_accessed=bytes_conv),
    )(xh_f, xl_f, w_hh, w_low, w_hl, mask_h, mask_l, pool_mat, up_mat)

    # BatchNorm statistics (training mode, biased variance): tiny XLA reduction
    # over the per-sample partial sums -> per-channel scale / shift.
    def bn_scale_shift(stats, gamma, beta, count):
        # TODO(synk): E[x^2]-E[x]^2 can lose precision for very large N*H*W;
        # fine at these sizes (stats accumulated in f32).
        total = jnp.sum(stats[:, :, 0], axis=0)
        total_sq = jnp.sum(stats[:, :, 1], axis=0)
        mean = total / count
        var = total_sq / count - mean * mean
        scale = gamma * lax.rsqrt(var + eps)
        shift = beta - mean * scale
        return scale, shift

    scale_h, shift_h = bn_scale_shift(st_h, gamma_h, beta_h, float(N * HW))
    scale_l, shift_l = bn_scale_shift(st_l, gamma_l, beta_l, float(N * HWl))

    flops_bn = int(2 * N * (c_out_h * HW + c_out_l * HWl))
    bytes_bn = int(N * (c_out_h * HW + c_out_l * HWl) * (2 + 4)
                   + (c_out_h + c_out_l) * 2 * 4)

    y_h, y_l = pl.pallas_call(
        _bn_affine_kernel,
        out_shape=(
            jax.ShapeDtypeStruct((N, c_out_h, HW), jnp.float32),
            jax.ShapeDtypeStruct((N, c_out_l, HWl), jnp.float32),
        ),
        grid=(N,),
        in_specs=[
            pl.BlockSpec((1, c_out_h, HW), lambda n: (n, 0, 0)),
            pl.BlockSpec((1, c_out_l, HWl), lambda n: (n, 0, 0)),
            pl.BlockSpec((c_out_h, 1), lambda n: (0, 0)),
            pl.BlockSpec((c_out_h, 1), lambda n: (0, 0)),
            pl.BlockSpec((c_out_l, 1), lambda n: (0, 0)),
            pl.BlockSpec((c_out_l, 1), lambda n: (0, 0)),
        ],
        out_specs=(
            pl.BlockSpec((1, c_out_h, HW), lambda n: (n, 0, 0)),
            pl.BlockSpec((1, c_out_l, HWl), lambda n: (n, 0, 0)),
        ),
        compiler_params=pltpu.CompilerParams(
            dimension_semantics=("parallel",),
            vmem_limit_bytes=64 * 1024 * 1024),
        cost_estimate=pl.CostEstimate(flops=flops_bn, transcendentals=0,
                                      bytes_accessed=bytes_bn),
    )(pre_h, pre_l,
      scale_h.reshape(c_out_h, 1), shift_h.reshape(c_out_h, 1),
      scale_l.reshape(c_out_l, 1), shift_l.reshape(c_out_l, 1))

    # Free reshapes back to NCHW (no transpose needed in this layout).
    return (y_h.reshape(N, c_out_h, H, W), y_l.reshape(N, c_out_l, Hl, Wl))


# ----------------------------------------------------------------------------
# Pure-JAX reference (for the correctness sanity check)
# ----------------------------------------------------------------------------
def _ref_conv(x, w, padding):
    return lax.conv_general_dilated(
        x, w, window_strides=(1, 1), padding=[(padding, padding)] * 2,
        dimension_numbers=("NCHW", "OIHW", "NCHW"),
        precision=lax.Precision.HIGHEST)


def _ref_bn(y, gamma, beta, eps=1e-5):
    mean = y.mean(axis=(0, 2, 3), keepdims=True)
    var = ((y - mean) ** 2).mean(axis=(0, 2, 3), keepdims=True)
    return ((y - mean) * lax.rsqrt(var + eps)
            * gamma.reshape(1, -1, 1, 1) + beta.reshape(1, -1, 1, 1))


if __name__ == "__main__":
    key = jax.random.PRNGKey(0)
    N = 2
    in_channels, out_channels = 8, 8
    kernel_size, padding, alpha = 3, 1, 0.5
    H = W = 16

    c_in_l = int(alpha * in_channels)
    c_in_h = in_channels - c_in_l
    c_out_l = int(alpha * out_channels)
    c_out_h = out_channels - c_out_l

    k_xh, k_xl, k_w, k_gh, k_bh, k_gl, k_bl = jax.random.split(key, 7)
    x_h = jax.random.normal(k_xh, (N, c_in_h, H, W), jnp.float32)
    x_l = jax.random.normal(k_xl, (N, c_in_l, H // 2, W // 2), jnp.float32)

    # nn.Conv2d weight layout: (out_channels, in_channels, kH, kW)
    weight = 0.1 * jax.random.normal(
        k_w, (out_channels, in_channels, kernel_size, kernel_size), jnp.float32)

    gamma_h = 1.0 + 0.1 * jax.random.normal(k_gh, (c_out_h,), jnp.float32)
    beta_h = 0.1 * jax.random.normal(k_bh, (c_out_h,), jnp.float32)
    gamma_l = 1.0 + 0.1 * jax.random.normal(k_gl, (c_out_l,), jnp.float32)
    beta_l = 0.1 * jax.random.normal(k_bl, (c_out_l,), jnp.float32)

    fwd = jax.jit(functools.partial(oct_conv_bn, padding=padding))
    y_h, y_l = fwd(x_h, x_l, weight, gamma_h, beta_h, gamma_l, beta_l)
    y_h = jax.block_until_ready(y_h)
    y_l = jax.block_until_ready(y_l)

    # ---- reference check (f32 HIGHEST reference vs bf16-MXU kernel) ----
    r_hh = _ref_conv(x_h, weight[:c_out_h, :c_in_h], padding)
    r_lh = _ref_conv(x_l, weight[:c_out_h, c_in_h:], padding)
    r_lh_up = jnp.repeat(jnp.repeat(r_lh, 2, axis=2), 2, axis=3)
    ref_h = _ref_bn(r_hh + r_lh_up, gamma_h, beta_h)

    x_h_pool = x_h.reshape(N, c_in_h, H // 2, 2, W // 2, 2).mean(axis=(3, 5))
    r_hl = _ref_conv(x_h_pool, weight[c_out_h:, :c_in_h], padding)
    r_ll = _ref_conv(x_l, weight[c_out_h:, c_in_h:], padding)
    ref_l = _ref_bn(r_hl + r_ll, gamma_l, beta_l)

    assert y_h.shape == (N, c_out_h, H, W)
    assert y_l.shape == (N, c_out_l, H // 2, W // 2)
    assert jnp.allclose(y_h, ref_h, atol=3e-2, rtol=3e-2)
    assert jnp.allclose(y_l, ref_l, atol=3e-2, rtol=3e-2)

    print("KERNEL_OK")
</pallas_src>

<mosaic_0001>
module attributes {stable_mosaic.version = 11 : i64} {
  func.func @_bn_affine_kernel(%arg0: i32, %arg1: memref<1x4x256xbf16, #tpu.memory_space<vmem>>, %arg2: memref<1x4x64xbf16, #tpu.memory_space<vmem>>, %arg3: memref<4x1xf32, #tpu.memory_space<vmem>>, %arg4: memref<4x1xf32, #tpu.memory_space<vmem>>, %arg5: memref<4x1xf32, #tpu.memory_space<vmem>>, %arg6: memref<4x1xf32, #tpu.memory_space<vmem>>, %arg7: memref<1x4x256xf32, #tpu.memory_space<vmem>>, %arg8: memref<1x4x64xf32, #tpu.memory_space<vmem>>) attributes {dimension_semantics = [#tpu.dimension_semantics<parallel>], iteration_bounds = array<i64: 2>, scalar_prefetch = 0 : i64, scratch_operands = 0 : i64, tpu.core_type = #tpu.core_type<tc>, window_params = [{transform_indices = @transform_0, window_bounds = array<i64: 1, 4, 256>}, {transform_indices = @transform_1, window_bounds = array<i64: 1, 4, 64>}, {pipeline_mode = #tpu.pipeline_mode<synchronous>, transform_indices = @transform_2, window_bounds = array<i64: 4, 1>}, {pipeline_mode = #tpu.pipeline_mode<synchronous>, transform_indices = @transform_3, window_bounds = array<i64: 4, 1>}, {pipeline_mode = #tpu.pipeline_mode<synchronous>, transform_indices = @transform_4, window_bounds = array<i64: 4, 1>}, {pipeline_mode = #tpu.pipeline_mode<synchronous>, transform_indices = @transform_5, window_bounds = array<i64: 4, 1>}, {transform_indices = @transform_6, window_bounds = array<i64: 1, 4, 256>}, {transform_indices = @transform_7, window_bounds = array<i64: 1, 4, 64>}]} {
    %c0 = arith.constant 0 : index
    %c0_0 = arith.constant 0 : index
    %c0_1 = arith.constant 0 : index
    %0 = vector.load %arg1[%c0, %c0_0, %c0_1] : memref<1x4x256xbf16, #tpu.memory_space<vmem>>, vector<1x4x256xbf16>
    %1 = vector.shape_cast %0 : vector<1x4x256xbf16> to vector<4x256xbf16>
    %2 = arith.extf %1 : vector<4x256xbf16> to vector<4x256xf32>
    %c0_2 = arith.constant 0 : index
    %c0_3 = arith.constant 0 : index
    %3 = vector.load %arg3[%c0_2, %c0_3] : memref<4x1xf32, #tpu.memory_space<vmem>>, vector<4x1xf32>
    %4 = vector.broadcast %3 : vector<4x1xf32> to vector<4x256xf32>
    %5 = arith.mulf %2, %4 : vector<4x256xf32>
    %c0_4 = arith.constant 0 : index
    %c0_5 = arith.constant 0 : index
    %6 = vector.load %arg4[%c0_4, %c0_5] : memref<4x1xf32, #tpu.memory_space<vmem>>, vector<4x1xf32>
    %7 = vector.broadcast %6 : vector<4x1xf32> to vector<4x256xf32>
    %8 = arith.addf %5, %7 : vector<4x256xf32>
    %c0_6 = arith.constant 0 : index
    %c0_7 = arith.constant 0 : index
    %c0_8 = arith.constant 0 : index
    %9 = vector.load %arg7[%c0_6, %c0_7, %c0_8] : memref<1x4x256xf32, #tpu.memory_space<vmem>>, vector<1x4x256xf32>
    %10 = vector.shape_cast %9 : vector<1x4x256xf32> to vector<4x256xf32>
    %11 = vector.shape_cast %8 : vector<4x256xf32> to vector<1x4x256xf32>
    tpu.vector_store %arg7[%c0_6, %c0_7, %c0_8], %11 {strides = array<i32>} : memref<1x4x256xf32, #tpu.memory_space<vmem>>, vector<1x4x256xf32>,
    %c0_9 = arith.constant 0 : index
    %c0_10 = arith.constant 0 : index
    %c0_11 = arith.constant 0 : index
    %12 = vector.load %arg2[%c0_9, %c0_10, %c0_11] : memref<1x4x64xbf16, #tpu.memory_space<vmem>>, vector<1x4x64xbf16>
    %13 = vector.shape_cast %12 : vector<1x4x64xbf16> to vector<4x64xbf16>
    %14 = arith.extf %13 : vector<4x64xbf16> to vector<4x64xf32>
    %c0_12 = arith.constant 0 : index
    %c0_13 = arith.constant 0 : index
    %15 = vector.load %arg5[%c0_12, %c0_13] : memref<4x1xf32, #tpu.memory_space<vmem>>, vector<4x1xf32>
    %16 = vector.broadcast %15 : vector<4x1xf32> to vector<4x64xf32>
    %17 = arith.mulf %14, %16 : vector<4x64xf32>
    %c0_14 = arith.constant 0 : index
    %c0_15 = arith.constant 0 : index
    %18 = vector.load %arg6[%c0_14, %c0_15] : memref<4x1xf32, #tpu.memory_space<vmem>>, vector<4x1xf32>
    %19 = vector.broadcast %18 : vector<4x1xf32> to vector<4x64xf32>
    %20 = arith.addf %17, %19 : vector<4x64xf32>
    %c0_16 = arith.constant 0 : index
    %c0_17 = arith.constant 0 : index
    %c0_18 = arith.constant 0 : index
    %21 = vector.load %arg8[%c0_16, %c0_17, %c0_18] : memref<1x4x64xf32, #tpu.memory_space<vmem>>, vector<1x4x64xf32>
    %22 = vector.shape_cast %21 : vector<1x4x64xf32> to vector<4x64xf32>
    %23 = vector.shape_cast %20 : vector<4x64xf32> to vector<1x4x64xf32>
    tpu.vector_store %arg8[%c0_16, %c0_17, %c0_18], %23 {strides = array<i32>} : memref<1x4x64xf32, #tpu.memory_space<vmem>>, vector<1x4x64xf32>,
    return
  }
  func.func @transform_0(%arg0: i32) -> (i32, i32, i32) {
    %c0_i32 = arith.constant 0 : i32
    %c0_i32_0 = arith.constant 0 : i32
    %c0_i32_1 = arith.constant 0 : i32
    return %arg0, %c0_i32, %c0_i32_0 : i32, i32, i32
  }
  func.func @transform_1(%arg0: i32) -> (i32, i32, i32) {
    %c0_i32 = arith.constant 0 : i32
    %c0_i32_0 = arith.constant 0 : i32
    %c0_i32_1 = arith.constant 0 : i32
    return %arg0, %c0_i32, %c0_i32_0 : i32, i32, i32
  }
  func.func @transform_2(%arg0: i32) -> (i32, i32) {
    %c0_i32 = arith.constant 0 : i32
    %c0_i32_0 = arith.constant 0 : i32
    %c0_i32_1 = arith.constant 0 : i32
    return %c0_i32, %c0_i32_0 : i32, i32
  }
  func.func @transform_3(%arg0: i32) -> (i32, i32) {
    %c0_i32 = arith.constant 0 : i32
    %c0_i32_0 = arith.constant 0 : i32
    %c0_i32_1 = arith.constant 0 : i32
    return %c0_i32, %c0_i32_0 : i32, i32
  }
  func.func @transform_4(%arg0: i32) -> (i32, i32) {
    %c0_i32 = arith.constant 0 : i32
    %c0_i32_0 = arith.constant 0 : i32
    %c0_i32_1 = arith.constant 0 : i32
    return %c0_i32, %c0_i32_0 : i32, i32
  }
  func.func @transform_5(%arg0: i32) -> (i32, i32) {
    %c0_i32 = arith.constant 0 : i32
    %c0_i32_0 = arith.constant 0 : i32
    %c0_i32_1 = arith.constant 0 : i32
    return %c0_i32, %c0_i32_0 : i32, i32
  }
  func.func @transform_6(%arg0: i32) -> (i32, i32, i32) {
    %c0_i32 = arith.constant 0 : i32
    %c0_i32_0 = arith.constant 0 : i32
    %c0_i32_1 = arith.constant 0 : i32
    return %arg0, %c0_i32, %c0_i32_0 : i32, i32, i32
  }
  func.func @transform_7(%arg0: i32) -> (i32, i32, i32) {
    %c0_i32 = arith.constant 0 : i32
    %c0_i32_0 = arith.constant 0 : i32
    %c0_i32_1 = arith.constant 0 : i32
    return %arg0, %c0_i32, %c0_i32_0 : i32, i32, i32
  }
}

module attributes {stable_mosaic.version = 11 : i64} {
  func.func @_oct_conv_kernel(%arg0: i32, %arg1: memref<1x8x256xf32, #tpu.memory_space<vmem>>, %arg2: memref<1x8x64xf32, #tpu.memory_space<vmem>>, %arg3: memref<4x72xbf16, #tpu.memory_space<vmem>>, %arg4: memref<8x72xbf16, #tpu.memory_space<vmem>>, %arg5: memref<4x72xbf16, #tpu.memory_space<vmem>>, %arg6: memref<9x256xf32, #tpu.memory_space<vmem>>, %arg7: memref<9x64xf32, #tpu.memory_space<vmem>>, %arg8: memref<256x64xbf16, #tpu.memory_space<vmem>>, %arg9: memref<64x256xbf16, #tpu.memory_space<vmem>>, %arg10: memref<1x4x256xbf16, #tpu.memory_space<vmem>>, %arg11: memref<1x4x64xbf16, #tpu.memory_space<vmem>>, %arg12: memref<1x4x2xf32, #tpu.memory_space<vmem>>, %arg13: memref<1x4x2xf32, #tpu.memory_space<vmem>>) attributes {dimension_semantics = [#tpu.dimension_semantics<parallel>], iteration_bounds = array<i64: 2>, scalar_prefetch = 0 : i64, scratch_operands = 0 : i64, tpu.core_type = #tpu.core_type<tc>, window_params = [{transform_indices = @transform_0, window_bounds = array<i64: 1, 8, 256>}, {transform_indices = @transform_1, window_bounds = array<i64: 1, 8, 64>}, {pipeline_mode = #tpu.pipeline_mode<synchronous>, transform_indices = @transform_2, window_bounds = array<i64: 4, 72>}, {pipeline_mode = #tpu.pipeline_mode<synchronous>, transform_indices = @transform_3, window_bounds = array<i64: 8, 72>}, {pipeline_mode = #tpu.pipeline_mode<synchronous>, transform_indices = @transform_4, window_bounds = array<i64: 4, 72>}, {pipeline_mode = #tpu.pipeline_mode<synchronous>, transform_indices = @transform_5, window_bounds = array<i64: 9, 256>}, {pipeline_mode = #tpu.pipeline_mode<synchronous>, transform_indices = @transform_6, window_bounds = array<i64: 9, 64>}, {pipeline_mode = #tpu.pipeline_mode<synchronous>, transform_indices = @transform_7, window_bounds = array<i64: 256, 64>}, {pipeline_mode = #tpu.pipeline_mode<synchronous>, transform_indices = @transform_8, window_bounds = array<i64: 64, 256>}, {transform_indices = @transform_9, window_bounds = array<i64: 1, 4, 256>}, {transform_indices = @transform_10, window_bounds = array<i64: 1, 4, 64>}, {transform_indices = @transform_11, window_bounds = array<i64: 1, 4, 2>}, {transform_indices = @transform_12, window_bounds = array<i64: 1, 4, 2>}]} {
    %c0 = arith.constant 0 : index
    %c0_0 = arith.constant 0 : index
    %c0_1 = arith.constant 0 : index
    %0 = vector.load %arg1[%c0, %c0_0, %c0_1] : memref<1x8x256xf32, #tpu.memory_space<vmem>>, vector<1x8x256xf32>
    %1 = vector.shape_cast %0 : vector<1x8x256xf32> to vector<8x256xf32>
    %c0_2 = arith.constant 0 : index
    %c0_3 = arith.constant 0 : index
    %c0_4 = arith.constant 0 : index
    %2 = vector.load %arg2[%c0_2, %c0_3, %c0_4] : memref<1x8x64xf32, #tpu.memory_space<vmem>>, vector<1x8x64xf32>
    %3 = vector.shape_cast %2 : vector<1x8x64xf32> to vector<8x64xf32>
    %c0_5 = arith.constant 0 : index
    %c0_6 = arith.constant 0 : index
    %4 = vector.load %arg6[%c0_5, %c0_6] : memref<9x256xf32, #tpu.memory_space<vmem>>, vector<9x256xf32>
    %c0_7 = arith.constant 0 : index
    %c0_8 = arith.constant 0 : index
    %5 = vector.load %arg7[%c0_7, %c0_8] : memref<9x64xf32, #tpu.memory_space<vmem>>, vector<9x64xf32>
    %c0_9 = arith.constant 0 : index
    %c0_10 = arith.constant 0 : index
    %6 = vector.load %arg3[%c0_9, %c0_10] : memref<4x72xbf16, #tpu.memory_space<vmem>>, vector<4x72xbf16>
    %7 = vector.extract_strided_slice %1 {offsets = [0, 239], sizes = [8, 17], strides = [1, 1]} : vector<8x256xf32> to vector<8x17xf32>
    %8 = vector.extract_strided_slice %1 {offsets = [0, 0], sizes = [8, 239], strides = [1, 1]} : vector<8x256xf32> to vector<8x239xf32>
    %9 = tpu.concatenate %7, %8 in 1 : vector<8x17xf32>, vector<8x239xf32> -> vector<8x256xf32>
    %10 = vector.extract_strided_slice %4 {offsets = [0, 0], sizes = [1, 256], strides = [1, 1]} : vector<9x256xf32> to vector<1x256xf32>
    %11 = vector.broadcast %10 : vector<1x256xf32> to vector<8x256xf32>
    %12 = arith.mulf %9, %11 : vector<8x256xf32>
    %13 = vector.extract_strided_slice %1 {offsets = [0, 240], sizes = [8, 16], strides = [1, 1]} : vector<8x256xf32> to vector<8x16xf32>
    %14 = vector.extract_strided_slice %1 {offsets = [0, 0], sizes = [8, 240], strides = [1, 1]} : vector<8x256xf32> to vector<8x240xf32>
    %15 = tpu.concatenate %13, %14 in 1 : vector<8x16xf32>, vector<8x240xf32> -> vector<8x256xf32>
    %16 = vector.extract_strided_slice %4 {offsets = [1, 0], sizes = [1, 256], strides = [1, 1]} : vector<9x256xf32> to vector<1x256xf32>
    %17 = vector.broadcast %16 : vector<1x256xf32> to vector<8x256xf32>
    %18 = arith.mulf %15, %17 : vector<8x256xf32>
    %19 = vector.extract_strided_slice %1 {offsets = [0, 241], sizes = [8, 15], strides = [1, 1]} : vector<8x256xf32> to vector<8x15xf32>
    %20 = vector.extract_strided_slice %1 {offsets = [0, 0], sizes = [8, 241], strides = [1, 1]} : vector<8x256xf32> to vector<8x241xf32>
    %21 = tpu.concatenate %19, %20 in 1 : vector<8x15xf32>, vector<8x241xf32> -> vector<8x256xf32>
    %22 = vector.extract_strided_slice %4 {offsets = [2, 0], sizes = [1, 256], strides = [1, 1]} : vector<9x256xf32> to vector<1x256xf32>
    %23 = vector.broadcast %22 : vector<1x256xf32> to vector<8x256xf32>
    %24 = arith.mulf %21, %23 : vector<8x256xf32>
    %25 = vector.extract_strided_slice %1 {offsets = [0, 255], sizes = [8, 1], strides = [1, 1]} : vector<8x256xf32> to vector<8x1xf32>
    %26 = vector.extract_strided_slice %1 {offsets = [0, 0], sizes = [8, 255], strides = [1, 1]} : vector<8x256xf32> to vector<8x255xf32>
    %27 = tpu.concatenate %25, %26 in 1 : vector<8x1xf32>, vector<8x255xf32> -> vector<8x256xf32>
    %28 = vector.extract_strided_slice %4 {offsets = [3, 0], sizes = [1, 256], strides = [1, 1]} : vector<9x256xf32> to vector<1x256xf32>
    %29 = vector.broadcast %28 : vector<1x256xf32> to vector<8x256xf32>
    %30 = arith.mulf %27, %29 : vector<8x256xf32>
    %31 = vector.extract_strided_slice %1 {offsets = [0, 1], sizes = [8, 255], strides = [1, 1]} : vector<8x256xf32> to vector<8x255xf32>
    %32 = vector.extract_strided_slice %1 {offsets = [0, 0], sizes = [8, 1], strides = [1, 1]} : vector<8x256xf32> to vector<8x1xf32>
    %33 = tpu.concatenate %31, %32 in 1 : vector<8x255xf32>, vector<8x1xf32> -> vector<8x256xf32>
    %34 = vector.extract_strided_slice %4 {offsets = [5, 0], sizes = [1, 256], strides = [1, 1]} : vector<9x256xf32> to vector<1x256xf32>
    %35 = vector.broadcast %34 : vector<1x256xf32> to vector<8x256xf32>
    %36 = arith.mulf %33, %35 : vector<8x256xf32>
    %37 = vector.extract_strided_slice %1 {offsets = [0, 15], sizes = [8, 241], strides = [1, 1]} : vector<8x256xf32> to vector<8x241xf32>
    %38 = vector.extract_strided_slice %1 {offsets = [0, 0], sizes = [8, 15], strides = [1, 1]} : vector<8x256xf32> to vector<8x15xf32>
    %39 = tpu.concatenate %37, %38 in 1 : vector<8x241xf32>, vector<8x15xf32> -> vector<8x256xf32>
    %40 = vector.extract_strided_slice %4 {offsets = [6, 0], sizes = [1, 256], strides = [1, 1]} : vector<9x256xf32> to vector<1x256xf32>
    %41 = vector.broadcast %40 : vector<1x256xf32> to vector<8x256xf32>
    %42 = arith.mulf %39, %41 : vector<8x256xf32>
    %43 = vector.extract_strided_slice %1 {offsets = [0, 16], sizes = [8, 240], strides = [1, 1]} : vector<8x256xf32> to vector<8x240xf32>
    %44 = vector.extract_strided_slice %1 {offsets = [0, 0], sizes = [8, 16], strides = [1, 1]} : vector<8x256xf32> to vector<8x16xf32>
    %45 = tpu.concatenate %43, %44 in 1 : vector<8x240xf32>, vector<8x16xf32> -> vector<8x256xf32>
    %46 = vector.extract_strided_slice %4 {offsets = [7, 0], sizes = [1, 256], strides = [1, 1]} : vector<9x256xf32> to vector<1x256xf32>
    %47 = vector.broadcast %46 : vector<1x256xf32> to vector<8x256xf32>
    %48 = arith.mulf %45, %47 : vector<8x256xf32>
    %49 = vector.extract_strided_slice %1 {offsets = [0, 17], sizes = [8, 239], strides = [1, 1]} : vector<8x256xf32> to vector<8x239xf32>
    %50 = vector.extract_strided_slice %1 {offsets = [0, 0], sizes = [8, 17], strides = [1, 1]} : vector<8x256xf32> to vector<8x17xf32>
    %51 = tpu.concatenate %49, %50 in 1 : vector<8x239xf32>, vector<8x17xf32> -> vector<8x256xf32>
    %52 = vector.extract_strided_slice %4 {offsets = [8, 0], sizes = [1, 256], strides = [1, 1]} : vector<9x256xf32> to vector<1x256xf32>
    %53 = vector.broadcast %52 : vector<1x256xf32> to vector<8x256xf32>
    %54 = arith.mulf %51, %53 : vector<8x256xf32>
    %55 = tpu.concatenate %12, %18, %24, %30, %1, %36, %42, %48, %54 in 0 : vector<8x256xf32>, vector<8x256xf32>, vector<8x256xf32>, vector<8x256xf32>, vector<8x256xf32>, vector<8x256xf32>, vector<8x256xf32>, vector<8x256xf32>, vector<8x256xf32> -> vector<72x256xf32>
    %56 = arith.truncf %55 : vector<72x256xf32> to vector<72x256xbf16>
    %cst = arith.constant dense<0.000000e+00> : vector<4x256xf32>
    %57 = tpu.matmul %6, %56, %cst {dimension_numbers = #tpu.dot_dimension_numbers<[1], [0], [0], [1], [0, 0, 1, 1], [], []>} : vector<4x72xbf16>, vector<72x256xbf16>, vector<4x256xf32> -> vector<4x256xf32>
    %c0_11 = arith.constant 0 : index
    %c0_12 = arith.constant 0 : index
    %58 = vector.load %arg4[%c0_11, %c0_12] : memref<8x72xbf16, #tpu.memory_space<vmem>>, vector<8x72xbf16>
    %59 = vector.extract_strided_slice %3 {offsets = [0, 55], sizes = [8, 9], strides = [1, 1]} : vector<8x64xf32> to vector<8x9xf32>
    %60 = vector.extract_strided_slice %3 {offsets = [0, 0], sizes = [8, 55], strides = [1, 1]} : vector<8x64xf32> to vector<8x55xf32>
    %61 = tpu.concatenate %59, %60 in 1 : vector<8x9xf32>, vector<8x55xf32> -> vector<8x64xf32>
    %62 = vector.extract_strided_slice %5 {offsets = [0, 0], sizes = [1, 64], strides = [1, 1]} : vector<9x64xf32> to vector<1x64xf32>
    %63 = vector.broadcast %62 : vector<1x64xf32> to vector<8x64xf32>
    %64 = arith.mulf %61, %63 : vector<8x64xf32>
    %65 = vector.extract_strided_slice %3 {offsets = [0, 56], sizes = [8, 8], strides = [1, 1]} : vector<8x64xf32> to vector<8x8xf32>
    %66 = vector.extract_strided_slice %3 {offsets = [0, 0], sizes = [8, 56], strides = [1, 1]} : vector<8x64xf32> to vector<8x56xf32>
    %67 = tpu.concatenate %65, %66 in 1 : vector<8x8xf32>, vector<8x56xf32> -> vector<8x64xf32>
    %68 = vector.extract_strided_slice %5 {offsets = [1, 0], sizes = [1, 64], strides = [1, 1]} : vector<9x64xf32> to vector<1x64xf32>
    %69 = vector.broadcast %68 : vector<1x64xf32> to vector<8x64xf32>
    %70 = arith.mulf %67, %69 : vector<8x64xf32>
    %71 = vector.extract_strided_slice %3 {offsets = [0, 57], sizes = [8, 7], strides = [1, 1]} : vector<8x64xf32> to vector<8x7xf32>
    %72 = vector.extract_strided_slice %3 {offsets = [0, 0], sizes = [8, 57], strides = [1, 1]} : vector<8x64xf32> to vector<8x57xf32>
    %73 = tpu.concatenate %71, %72 in 1 : vector<8x7xf32>, vector<8x57xf32> -> vector<8x64xf32>
    %74 = vector.extract_strided_slice %5 {offsets = [2, 0], sizes = [1, 64], strides = [1, 1]} : vector<9x64xf32> to vector<1x64xf32>
    %75 = vector.broadcast %74 : vector<1x64xf32> to vector<8x64xf32>
    %76 = arith.mulf %73, %75 : vector<8x64xf32>
    %77 = vector.extract_strided_slice %3 {offsets = [0, 63], sizes = [8, 1], strides = [1, 1]} : vector<8x64xf32> to vector<8x1xf32>
    %78 = vector.extract_strided_slice %3 {offsets = [0, 0], sizes = [8, 63], strides = [1, 1]} : vector<8x64xf32> to vector<8x63xf32>
    %79 = tpu.concatenate %77, %78 in 1 : vector<8x1xf32>, vector<8x63xf32> -> vector<8x64xf32>
    %80 = vector.extract_strided_slice %5 {offsets = [3, 0], sizes = [1, 64], strides = [1, 1]} : vector<9x64xf32> to vector<1x64xf32>
    %81 = vector.broadcast %80 : vector<1x64xf32> to vector<8x64xf32>
    %82 = arith.mulf %79, %81 : vector<8x64xf32>
    %83 = vector.extract_strided_slice %3 {offsets = [0, 1], sizes = [8, 63], strides = [1, 1]} : vector<8x64xf32> to vector<8x63xf32>
    %84 = vector.extract_strided_slice %3 {offsets = [0, 0], sizes = [8, 1], strides = [1, 1]} : vector<8x64xf32> to vector<8x1xf32>
    %85 = tpu.concatenate %83, %84 in 1 : vector<8x63xf32>, vector<8x1xf32> -> vector<8x64xf32>
    %86 = vector.extract_strided_slice %5 {offsets = [5, 0], sizes = [1, 64], strides = [1, 1]} : vector<9x64xf32> to vector<1x64xf32>
    %87 = vector.broadcast %86 : vector<1x64xf32> to vector<8x64xf32>
    %88 = arith.mulf %85, %87 : vector<8x64xf32>
    %89 = vector.extract_strided_slice %3 {offsets = [0, 7], sizes = [8, 57], strides = [1, 1]} : vector<8x64xf32> to vector<8x57xf32>
    %90 = vector.extract_strided_slice %3 {offsets = [0, 0], sizes = [8, 7], strides = [1, 1]} : vector<8x64xf32> to vector<8x7xf32>
    %91 = tpu.concatenate %89, %90 in 1 : vector<8x57xf32>, vector<8x7xf32> -> vector<8x64xf32>
    %92 = vector.extract_strided_slice %5 {offsets = [6, 0], sizes = [1, 64], strides = [1, 1]} : vector<9x64xf32> to vector<1x64xf32>
    %93 = vector.broadcast %92 : vector<1x64xf32> to vector<8x64xf32>
    %94 = arith.mulf %91, %93 : vector<8x64xf32>
    %95 = vector.extract_strided_slice %3 {offsets = [0, 8], sizes = [8, 56], strides = [1, 1]} : vector<8x64xf32> to vector<8x56xf32>
    %96 = vector.extract_strided_slice %3 {offsets = [0, 0], sizes = [8, 8], strides = [1, 1]} : vector<8x64xf32> to vector<8x8xf32>
    %97 = tpu.concatenate %95, %96 in 1 : vector<8x56xf32>, vector<8x8xf32> -> vector<8x64xf32>
    %98 = vector.extract_strided_slice %5 {offsets = [7, 0], sizes = [1, 64], strides = [1, 1]} : vector<9x64xf32> to vector<1x64xf32>
    %99 = vector.broadcast %98 : vector<1x64xf32> to vector<8x64xf32>
    %100 = arith.mulf %97, %99 : vector<8x64xf32>
    %101 = vector.extract_strided_slice %3 {offsets = [0, 9], sizes = [8, 55], strides = [1, 1]} : vector<8x64xf32> to vector<8x55xf32>
    %102 = vector.extract_strided_slice %3 {offsets = [0, 0], sizes = [8, 9], strides = [1, 1]} : vector<8x64xf32> to vector<8x9xf32>
    %103 = tpu.concatenate %101, %102 in 1 : vector<8x55xf32>, vector<8x9xf32> -> vector<8x64xf32>
    %104 = vector.extract_strided_slice %5 {offsets = [8, 0], sizes = [1, 64], strides = [1, 1]} : vector<9x64xf32> to vector<1x64xf32>
    %105 = vector.broadcast %104 : vector<1x64xf32> to vector<8x64xf32>
    %106 = arith.mulf %103, %105 : vector<8x64xf32>
    %107 = tpu.concatenate %64, %70, %76, %82, %3, %88, %94, %100, %106 in 0 : vector<8x64xf32>, vector<8x64xf32>, vector<8x64xf32>, vector<8x64xf32>, vector<8x64xf32>, vector<8x64xf32>, vector<8x64xf32>, vector<8x64xf32>, vector<8x64xf32> -> vector<72x64xf32>
    %108 = arith.truncf %107 : vector<72x64xf32> to vector<72x64xbf16>
    %cst_13 = arith.constant dense<0.000000e+00> : vector<8x64xf32>
    %109 = tpu.matmul %58, %108, %cst_13 {dimension_numbers = #tpu.dot_dimension_numbers<[1], [0], [0], [1], [0, 0, 1, 1], [], []>} : vector<8x72xbf16>, vector<72x64xbf16>, vector<8x64xf32> -> vector<8x64xf32>
    %110 = vector.extract_strided_slice %109 {offsets = [0, 0], sizes = [4, 64], strides = [1, 1]} : vector<8x64xf32> to vector<4x64xf32>
    %111 = vector.extract_strided_slice %109 {offsets = [4, 0], sizes = [4, 64], strides = [1, 1]} : vector<8x64xf32> to vector<4x64xf32>
    %112 = arith.truncf %110 : vector<4x64xf32> to vector<4x64xbf16>
    %c0_14 = arith.constant 0 : index
    %c0_15 = arith.constant 0 : index
    %113 = vector.load %arg9[%c0_14, %c0_15] : memref<64x256xbf16, #tpu.memory_space<vmem>>, vector<64x256xbf16>
    %cst_16 = arith.constant dense<0.000000e+00> : vector<4x256xf32>
    %114 = tpu.matmul %112, %113, %cst_16 {dimension_numbers = #tpu.dot_dimension_numbers<[1], [0], [0], [1], [0, 0, 1, 1], [], []>} : vector<4x64xbf16>, vector<64x256xbf16>, vector<4x256xf32> -> vector<4x256xf32>
    %115 = arith.addf %57, %114 : vector<4x256xf32>
    %116 = arith.truncf %115 : vector<4x256xf32> to vector<4x256xbf16>
    %c0_17 = arith.constant 0 : index
    %c0_18 = arith.constant 0 : index
    %c0_19 = arith.constant 0 : index
    %117 = vector.load %arg10[%c0_17, %c0_18, %c0_19] : memref<1x4x256xbf16, #tpu.memory_space<vmem>>, vector<1x4x256xbf16>
    %118 = vector.shape_cast %117 : vector<1x4x256xbf16> to vector<4x256xbf16>
    %119 = vector.shape_cast %116 : vector<4x256xbf16> to vector<1x4x256xbf16>
    tpu.vector_store %arg10[%c0_17, %c0_18, %c0_19], %119 {strides = array<i32>} : memref<1x4x256xbf16, #tpu.memory_space<vmem>>, vector<1x4x256xbf16>,
    %cst_20 = arith.constant dense<0.000000e+00> : vector<4xf32>
    %120 = vector.multi_reduction <add>, %115, %cst_20 [1] : vector<4x256xf32> to vector<4xf32>
    %121 = vector.shape_cast %120 : vector<4xf32> to vector<4x1xf32>
    %122 = arith.mulf %115, %115 : vector<4x256xf32>
    %cst_21 = arith.constant dense<0.000000e+00> : vector<4xf32>
    %123 = vector.multi_reduction <add>, %122, %cst_21 [1] : vector<4x256xf32> to vector<4xf32>
    %124 = vector.shape_cast %123 : vector<4xf32> to vector<4x1xf32>
    %125 = tpu.concatenate %121, %124 in 1 : vector<4x1xf32>, vector<4x1xf32> -> vector<4x2xf32>
    %c0_22 = arith.constant 0 : index
    %c0_23 = arith.constant 0 : index
    %c0_24 = arith.constant 0 : index
    %126 = vector.load %arg12[%c0_22, %c0_23, %c0_24] : memref<1x4x2xf32, #tpu.memory_space<vmem>>, vector<1x4x2xf32>
    %127 = vector.shape_cast %126 : vector<1x4x2xf32> to vector<4x2xf32>
    %128 = vector.shape_cast %125 : vector<4x2xf32> to vector<1x4x2xf32>
    tpu.vector_store %arg12[%c0_22, %c0_23, %c0_24], %128 {strides = array<i32>} : memref<1x4x2xf32, #tpu.memory_space<vmem>>, vector<1x4x2xf32>,
    %129 = arith.truncf %1 : vector<8x256xf32> to vector<8x256xbf16>
    %c0_25 = arith.constant 0 : index
    %c0_26 = arith.constant 0 : index
    %130 = vector.load %arg8[%c0_25, %c0_26] : memref<256x64xbf16, #tpu.memory_space<vmem>>, vector<256x64xbf16>
    %cst_27 = arith.constant dense<0.000000e+00> : vector<8x64xf32>
    %131 = tpu.matmul %129, %130, %cst_27 {dimension_numbers = #tpu.dot_dimension_numbers<[1], [0], [0], [1], [0, 0, 1, 1], [], []>} : vector<8x256xbf16>, vector<256x64xbf16>, vector<8x64xf32> -> vector<8x64xf32>
    %c0_28 = arith.constant 0 : index
    %c0_29 = arith.constant 0 : index
    %132 = vector.load %arg5[%c0_28, %c0_29] : memref<4x72xbf16, #tpu.memory_space<vmem>>, vector<4x72xbf16>
    %133 = vector.extract_strided_slice %131 {offsets = [0, 55], sizes = [8, 9], strides = [1, 1]} : vector<8x64xf32> to vector<8x9xf32>
    %134 = vector.extract_strided_slice %131 {offsets = [0, 0], sizes = [8, 55], strides = [1, 1]} : vector<8x64xf32> to vector<8x55xf32>
    %135 = tpu.concatenate %133, %134 in 1 : vector<8x9xf32>, vector<8x55xf32> -> vector<8x64xf32>
    %136 = vector.extract_strided_slice %5 {offsets = [0, 0], sizes = [1, 64], strides = [1, 1]} : vector<9x64xf32> to vector<1x64xf32>
    %137 = vector.broadcast %136 : vector<1x64xf32> to vector<8x64xf32>
    %138 = arith.mulf %135, %137 : vector<8x64xf32>
    %139 = vector.extract_strided_slice %131 {offsets = [0, 56], sizes = [8, 8], strides = [1, 1]} : vector<8x64xf32> to vector<8x8xf32>
    %140 = vector.extract_strided_slice %131 {offsets = [0, 0], sizes = [8, 56], strides = [1, 1]} : vector<8x64xf32> to vector<8x56xf32>
    %141 = tpu.concatenate %139, %140 in 1 : vector<8x8xf32>, vector<8x56xf32> -> vector<8x64xf32>
    %142 = vector.extract_strided_slice %5 {offsets = [1, 0], sizes = [1, 64], strides = [1, 1]} : vector<9x64xf32> to vector<1x64xf32>
    %143 = vector.broadcast %142 : vector<1x64xf32> to vector<8x64xf32>
    %144 = arith.mulf %141, %143 : vector<8x64xf32>
    %145 = vector.extract_strided_slice %131 {offsets = [0, 57], sizes = [8, 7], strides = [1, 1]} : vector<8x64xf32> to vector<8x7xf32>
    %146 = vector.extract_strided_slice %131 {offsets = [0, 0], sizes = [8, 57], strides = [1, 1]} : vector<8x64xf32> to vector<8x57xf32>
    %147 = tpu.concatenate %145, %146 in 1 : vector<8x7xf32>, vector<8x57xf32> -> vector<8x64xf32>
    %148 = vector.extract_strided_slice %5 {offsets = [2, 0], sizes = [1, 64], strides = [1, 1]} : vector<9x64xf32> to vector<1x64xf32>
    %149 = vector.broadcast %148 : vector<1x64xf32> to vector<8x64xf32>
    %150 = arith.mulf %147, %149 : vector<8x64xf32>
    %151 = vector.extract_strided_slice %131 {offsets = [0, 63], sizes = [8, 1], strides = [1, 1]} : vector<8x64xf32> to vector<8x1xf32>
    %152 = vector.extract_strided_slice %131 {offsets = [0, 0], sizes = [8, 63], strides = [1, 1]} : vector<8x64xf32> to vector<8x63xf32>
    %153 = tpu.concatenate %151, %152 in 1 : vector<8x1xf32>, vector<8x63xf32> -> vector<8x64xf32>
    %154 = vector.extract_strided_slice %5 {offsets = [3, 0], sizes = [1, 64], strides = [1, 1]} : vector<9x64xf32> to vector<1x64xf32>
    %155 = vector.broadcast %154 : vector<1x64xf32> to vector<8x64xf32>
    %156 = arith.mulf %153, %155 : vector<8x64xf32>
    %157 = vector.extract_strided_slice %131 {offsets = [0, 1], sizes = [8, 63], strides = [1, 1]} : vector<8x64xf32> to vector<8x63xf32>
    %158 = vector.extract_strided_slice %131 {offsets = [0, 0], sizes = [8, 1], strides = [1, 1]} : vector<8x64xf32> to vector<8x1xf32>
    %159 = tpu.concatenate %157, %158 in 1 : vector<8x63xf32>, vector<8x1xf32> -> vector<8x64xf32>
    %160 = vector.extract_strided_slice %5 {offsets = [5, 0], sizes = [1, 64], strides = [1, 1]} : vector<9x64xf32> to vector<1x64xf32>
    %161 = vector.broadcast %160 : vector<1x64xf32> to vector<8x64xf32>
    %162 = arith.mulf %159, %161 : vector<8x64xf32>
    %163 = vector.extract_strided_slice %131 {offsets = [0, 7], sizes = [8, 57], strides = [1, 1]} : vector<8x64xf32> to vector<8x57xf32>
    %164 = vector.extract_strided_slice %131 {offsets = [0, 0], sizes = [8, 7], strides = [1, 1]} : vector<8x64xf32> to vector<8x7xf32>
    %165 = tpu.concatenate %163, %164 in 1 : vector<8x57xf32>, vector<8x7xf32> -> vector<8x64xf32>
    %166 = vector.extract_strided_slice %5 {offsets = [6, 0], sizes = [1, 64], strides = [1, 1]} : vector<9x64xf32> to vector<1x64xf32>
    %167 = vector.broadcast %166 : vector<1x64xf32> to vector<8x64xf32>
    %168 = arith.mulf %165, %167 : vector<8x64xf32>
    %169 = vector.extract_strided_slice %131 {offsets = [0, 8], sizes = [8, 56], strides = [1, 1]} : vector<8x64xf32> to vector<8x56xf32>
    %170 = vector.extract_strided_slice %131 {offsets = [0, 0], sizes = [8, 8], strides = [1, 1]} : vector<8x64xf32> to vector<8x8xf32>
    %171 = tpu.concatenate %169, %170 in 1 : vector<8x56xf32>, vector<8x8xf32> -> vector<8x64xf32>
    %172 = vector.extract_strided_slice %5 {offsets = [7, 0], sizes = [1, 64], strides = [1, 1]} : vector<9x64xf32> to vector<1x64xf32>
    %173 = vector.broadcast %172 : vector<1x64xf32> to vector<8x64xf32>
    %174 = arith.mulf %171, %173 : vector<8x64xf32>
    %175 = vector.extract_strided_slice %131 {offsets = [0, 9], sizes = [8, 55], strides = [1, 1]} : vector<8x64xf32> to vector<8x55xf32>
    %176 = vector.extract_strided_slice %131 {offsets = [0, 0], sizes = [8, 9], strides = [1, 1]} : vector<8x64xf32> to vector<8x9xf32>
    %177 = tpu.concatenate %175, %176 in 1 : vector<8x55xf32>, vector<8x9xf32> -> vector<8x64xf32>
    %178 = vector.extract_strided_slice %5 {offsets = [8, 0], sizes = [1, 64], strides = [1, 1]} : vector<9x64xf32> to vector<1x64xf32>
    %179 = vector.broadcast %178 : vector<1x64xf32> to vector<8x64xf32>
    %180 = arith.mulf %177, %179 : vector<8x64xf32>
    %181 = tpu.concatenate %138, %144, %150, %156, %131, %162, %168, %174, %180 in 0 : vector<8x64xf32>, vector<8x64xf32>, vector<8x64xf32>, vector<8x64xf32>, vector<8x64xf32>, vector<8x64xf32>, vector<8x64xf32>, vector<8x64xf32>, vector<8x64xf32> -> vector<72x64xf32>
    %182 = arith.truncf %181 : vector<72x64xf32> to vector<72x64xbf16>
    %cst_30 = arith.constant dense<0.000000e+00> : vector<4x64xf32>
    %183 = tpu.matmul %132, %182, %cst_30 {dimension_numbers = #tpu.dot_dimension_numbers<[1], [0], [0], [1], [0, 0, 1, 1], [], []>} : vector<4x72xbf16>, vector<72x64xbf16>, vector<4x64xf32> -> vector<4x64xf32>
    %184 = arith.addf %183, %111 : vector<4x64xf32>
    %185 = arith.truncf %184 : vector<4x64xf32> to vector<4x64xbf16>
    %c0_31 = arith.constant 0 : index
    %c0_32 = arith.constant 0 : index
    %c0_33 = arith.constant 0 : index
    %186 = vector.load %arg11[%c0_31, %c0_32, %c0_33] : memref<1x4x64xbf16, #tpu.memory_space<vmem>>, vector<1x4x64xbf16>
    %187 = vector.shape_cast %186 : vector<1x4x64xbf16> to vector<4x64xbf16>
    %188 = vector.shape_cast %185 : vector<4x64xbf16> to vector<1x4x64xbf16>
    tpu.vector_store %arg11[%c0_31, %c0_32, %c0_33], %188 {strides = array<i32>} : memref<1x4x64xbf16, #tpu.memory_space<vmem>>, vector<1x4x64xbf16>,
    %cst_34 = arith.constant dense<0.000000e+00> : vector<4xf32>
    %189 = vector.multi_reduction <add>, %184, %cst_34 [1] : vector<4x64xf32> to vector<4xf32>
    %190 = vector.shape_cast %189 : vector<4xf32> to vector<4x1xf32>
    %191 = arith.mulf %184, %184 : vector<4x64xf32>
    %cst_35 = arith.constant dense<0.000000e+00> : vector<4xf32>
    %192 = vector.multi_reduction <add>, %191, %cst_35 [1] : vector<4x64xf32> to vector<4xf32>
    %193 = vector.shape_cast %192 : vector<4xf32> to vector<4x1xf32>
    %194 = tpu.concatenate %190, %193 in 1 : vector<4x1xf32>, vector<4x1xf32> -> vector<4x2xf32>
    %c0_36 = arith.constant 0 : index
    %c0_37 = arith.constant 0 : index
    %c0_38 = arith.constant 0 : index
    %195 = vector.load %arg13[%c0_36, %c0_37, %c0_38] : memref<1x4x2xf32, #tpu.memory_space<vmem>>, vector<1x4x2xf32>
    %196 = vector.shape_cast %195 : vector<1x4x2xf32> to vector<4x2xf32>
    %197 = vector.shape_cast %194 : vector<4x2xf32> to vector<1x4x2xf32>
    tpu.vector_store %arg13[%c0_36, %c0_37, %c0_38], %197 {strides = array<i32>} : memref<1x4x2xf32, #tpu.memory_space<vmem>>, vector<1x4x2xf32>,
    return
  }
  func.func @transform_0(%arg0: i32) -> (i32, i32, i32) {
    %c0_i32 = arith.constant 0 : i32
    %c0_i32_0 = arith.constant 0 : i32
    %c0_i32_1 = arith.constant 0 : i32
    return %arg0, %c0_i32, %c0_i32_0 : i32, i32, i32
  }
  func.func @transform_1(%arg0: i32) -> (i32, i32, i32) {
    %c0_i32 = arith.constant 0 : i32
    %c0_i32_0 = arith.constant 0 : i32
    %c0_i32_1 = arith.constant 0 : i32
    return %arg0, %c0_i32, %c0_i32_0 : i32, i32, i32
  }
  func.func @transform_2(%arg0: i32) -> (i32, i32) {
    %c0_i32 = arith.constant 0 : i32
    %c0_i32_0 = arith.constant 0 : i32
    %c0_i32_1 = arith.constant 0 : i32
    return %c0_i32, %c0_i32_0 : i32, i32
  }
  func.func @transform_3(%arg0: i32) -> (i32, i32) {
    %c0_i32 = arith.constant 0 : i32
    %c0_i32_0 = arith.constant 0 : i32
    %c0_i32_1 = arith.constant 0 : i32
    return %c0_i32, %c0_i32_0 : i32, i32
  }
  func.func @transform_4(%arg0: i32) -> (i32, i32) {
    %c0_i32 = arith.constant 0 : i32
    %c0_i32_0 = arith.constant 0 : i32
    %c0_i32_1 = arith.constant 0 : i32
    return %c0_i32, %c0_i32_0 : i32, i32
  }
  func.func @transform_5(%arg0: i32) -> (i32, i32) {
    %c0_i32 = arith.constant 0 : i32
    %c0_i32_0 = arith.constant 0 : i32
    %c0_i32_1 = arith.constant 0 : i32
    return %c0_i32, %c0_i32_0 : i32, i32
  }
  func.func @transform_6(%arg0: i32) -> (i32, i32) {
    %c0_i32 = arith.constant 0 : i32
    %c0_i32_0 = arith.constant 0 : i32
    %c0_i32_1 = arith.constant 0 : i32
    return %c0_i32, %c0_i32_0 : i32, i32
  }
  func.func @transform_7(%arg0: i32) -> (i32, i32) {
    %c0_i32 = arith.constant 0 : i32
    %c0_i32_0 = arith.constant 0 : i32
    %c0_i32_1 = arith.constant 0 : i32
    return %c0_i32, %c0_i32_0 : i32, i32
  }
  func.func @transform_8(%arg0: i32) -> (i32, i32) {
    %c0_i32 = arith.constant 0 : i32
    %c0_i32_0 = arith.constant 0 : i32
    %c0_i32_1 = arith.constant 0 : i32
    return %c0_i32, %c0_i32_0 : i32, i32
  }
  func.func @transform_9(%arg0: i32) -> (i32, i32, i32) {
    %c0_i32 = arith.constant 0 : i32
    %c0_i32_0 = arith.constant 0 : i32
    %c0_i32_1 = arith.constant 0 : i32
    return %arg0, %c0_i32, %c0_i32_0 : i32, i32, i32
  }
  func.func @transform_10(%arg0: i32) -> (i32, i32, i32) {
    %c0_i32 = arith.constant 0 : i32
    %c0_i32_0 = arith.constant 0 : i32
    %c0_i32_1 = arith.constant 0 : i32
    return %arg0, %c0_i32, %c0_i32_0 : i32, i32, i32
  }
  func.func @transform_11(%arg0: i32) -> (i32, i32, i32) {
    %c0_i32 = arith.constant 0 : i32
    %c0_i32_0 = arith.constant 0 : i32
    %c0_i32_1 = arith.constant 0 : i32
    return %arg0, %c0_i32, %c0_i32_0 : i32, i32, i32
  }
  func.func @transform_12(%arg0: i32) -> (i32, i32, i32) {
    %c0_i32 = arith.constant 0 : i32
    %c0_i32_0 = arith.constant 0 : i32
    %c0_i32_1 = arith.constant 0 : i32
    return %arg0, %c0_i32, %c0_i32_0 : i32, i32, i32
  }
}

</mosaic_0001>

<llo_original>
// kernel: oct_conv_bn.3
$region0: #{oct_conv_bn.3}
  #allocation0 [shape = 'u32[]', space=smem, size = 0x4, offset = 0x4, fixed_abs, tag = 'smem constant byte address 0x4 - core index']
  #allocation1 [shape = 'u32[72,128]{1,0:T(1,128)}', space=vmem, size = 0x9000, scoped, tag = 'internal scratch']
  %s0 = inlined_call_operand.vmem [shape: bf16[2,4,256], index: 0, kind: input, shape index: {}]
  %s1 = inlined_call_operand.vmem [shape: bf16[2,4,64], index: 1, kind: input, shape index: {}]
  %s2 = inlined_call_operand.vmem [shape: f32[4,1], index: 2, kind: input, shape index: {}]
  %s3 = inlined_call_operand.vmem [shape: f32[4,1], index: 3, kind: input, shape index: {}]
  %s4 = inlined_call_operand.vmem [shape: f32[4,1], index: 4, kind: input, shape index: {}]
  %s5 = inlined_call_operand.vmem [shape: f32[4,1], index: 5, kind: input, shape index: {}]
  %s6 = inlined_call_operand.vmem [shape: f32[2,4,256], index: 6, kind: output, shape index: {0}]
  %s7 = inlined_call_operand.vmem [shape: f32[2,4,64], index: 7, kind: output, shape index: {1}]
  %8 = xla_tuple %s6, %s7
  %s9 = sld [smem:[#allocation0]]
  $region65: #{oct_conv_bn.3} parent=0
    _
  %s11 = ssub.s32 1, %s9
  %s12 = scalar_select 0, %s11, %s9
  loop: start=0, step=1, limit=4
  $region2: #{oct_conv_bn.3} parent=0 // loop_pre_header
    _
  $region3: #{oct_conv_bn.3} parent=0 // loop_header
    %s14 = sphi 0, %s18
    %p15 = scmp.ge.s32.totalorder %s14, 4
    %s24 = sphi 0, %s26
    %s27 = sphi 0, %s24
    %s28 = sphi 0, %s27
    %s44 = sphi 0, %s28
    %s50 = sphi 0, %s52
    %s53 = sphi 0, %s50
    %s54 = sphi 0, %s53
    %s70 = sphi 0, %s54
    %s74 = sphi 0, %s74
    %s76 = sphi 0, %s74
    %s77 = sphi 0, %s76
    %s91 = sphi 0, %s77
    %s95 = sphi 0, %s95
    %s97 = sphi 0, %s95
    %s98 = sphi 0, %s97
    %s112 = sphi 0, %s98
    %s116 = sphi 0, %s116
    %s118 = sphi 0, %s116
    %s119 = sphi 0, %s118
    %s133 = sphi 0, %s119
    %s137 = sphi 0, %s137
    %s139 = sphi 0, %s137
    %s140 = sphi 0, %s139
    %s154 = sphi 0, %s140
    %s160 = sphi 0, %s162
    %s163 = sphi 0, %s160
    %s164 = sphi 0, %s163
    %s180 = sphi 0, %s164
    %s186 = sphi 0, %s188
    %s189 = sphi 0, %s186
    %s190 = sphi 0, %s189
    %s206 = sphi 0, %s190
  $region4: #{oct_conv_bn.3} parent=0 // loop_header_branch
    %17 = sbr.rel (%p15) target = $region8
  $region5: #{oct_conv_bn.3} parent=0 // loop_body
    %s19 = ssub.s32 %s14, 1
    %s20 = ssub.s32 %s14, 2
    %s21 = sadd.s32 %s14, 1
    %s22 = ssub.s32 %s14, %s21
    %p23 = scmp.eq.s32.totalorder %s22, 0
    %s25 = sadd.s32 %s24, 1
    %s26 = scalar_select %p23, %s24, %s25
    %p29 = pneg %p23
    %p30 = scmp.eq.s32.totalorder %s14, 1
    %p31 = por %p29, %p30
    %p32 = scmp.ne.s32.totalorder %s24, %s27
    %p33 = scmp.eq.s32.totalorder %s14, 0
    %p34 = por %p32, %p33
    %p35 = scmp.ne.s32.totalorder %s24, %s27
    %p36 = scmp.eq.s32.totalorder %s19, 1
    %p37 = por %p35, %p36
    %p38 = scmp.ne.s32.totalorder %s27, %s28
    %p39 = scmp.eq.s32.totalorder %s19, 0
    %p40 = por %p38, %p39
    %p41 = scmp.ne.s32.totalorder %s27, %s28
    %p42 = scmp.eq.s32.totalorder %s20, 1
    %p43 = por %p41, %p42
    %p45 = scmp.ne.s32.totalorder %s28, %s44
    %p46 = scmp.eq.s32.totalorder %s20, 0
    %p47 = por %p45, %p46
    %s48 = ssub.s32 %s14, %s21
    %p49 = scmp.eq.s32.totalorder %s48, 0
    %s51 = sadd.s32 %s50, 1
    %s52 = scalar_select %p49, %s50, %s51
    %p55 = pneg %p49
    %p56 = scmp.eq.s32.totalorder %s14, 1
    %p57 = por %p55, %p56
    %p58 = scmp.ne.s32.totalorder %s50, %s53
    %p59 = scmp.eq.s32.totalorder %s14, 0
    %p60 = por %p58, %p59
    %p61 = scmp.ne.s32.totalorder %s50, %s53
    %p62 = scmp.eq.s32.totalorder %s19, 1
    %p63 = por %p61, %p62
    %p64 = scmp.ne.s32.totalorder %s53, %s54
    %p65 = scmp.eq.s32.totalorder %s19, 0
    %p66 = por %p64, %p65
    %p67 = scmp.ne.s32.totalorder %s53, %s54
    %p68 = scmp.eq.s32.totalorder %s20, 1
    %p69 = por %p67, %p68
    %p71 = scmp.ne.s32.totalorder %s54, %s70
    %p72 = scmp.eq.s32.totalorder %s20, 0
    %p73 = por %p71, %p72
    %s75 = sadd.s32 %s74, 1
    %p78 = scmp.eq.s32.totalorder %s14, 1
    %p79 = scmp.ne.s32.totalorder %s74, %s76
    %p80 = scmp.eq.s32.totalorder %s14, 0
    %p81 = por %p79, %p80
    %p82 = scmp.ne.s32.totalorder %s74, %s76
    %p83 = scmp.eq.s32.totalorder %s19, 1
    %p84 = por %p82, %p83
    %p85 = scmp.ne.s32.totalorder %s76, %s77
    %p86 = scmp.eq.s32.totalorder %s19, 0
    %p87 = por %p85, %p86
    %p88 = scmp.ne.s32.totalorder %s76, %s77
    %p89 = scmp.eq.s32.totalorder %s20, 1
    %p90 = por %p88, %p89
    %p92 = scmp.ne.s32.totalorder %s77, %s91
    %p93 = scmp.eq.s32.totalorder %s20, 0
    %p94 = por %p92, %p93
    %s96 = sadd.s32 %s95, 1
    %p99 = scmp.eq.s32.totalorder %s14, 1
    %p100 = scmp.ne.s32.totalorder %s95, %s97
    %p101 = scmp.eq.s32.totalorder %s14, 0
    %p102 = por %p100, %p101
    %p103 = scmp.ne.s32.totalorder %s95, %s97
    %p104 = scmp.eq.s32.totalorder %s19, 1
    %p105 = por %p103, %p104
    %p106 = scmp.ne.s32.totalorder %s97, %s98
    %p107 = scmp.eq.s32.totalorder %s19, 0
    %p108 = por %p106, %p107
    %p109 = scmp.ne.s32.totalorder %s97, %s98
    %p110 = scmp.eq.s32.totalorder %s20, 1
    %p111 = por %p109, %p110
    %p113 = scmp.ne.s32.totalorder %s98, %s112
    %p114 = scmp.eq.s32.totalorder %s20, 0
    %p115 = por %p113, %p114
    %s117 = sadd.s32 %s116, 1
    %p120 = scmp.eq.s32.totalorder %s14, 1
    %p121 = scmp.ne.s32.totalorder %s116, %s118
    %p122 = scmp.eq.s32.totalorder %s14, 0
    %p123 = por %p121, %p122
    %p124 = scmp.ne.s32.totalorder %s116, %s118
    %p125 = scmp.eq.s32.totalorder %s19, 1
    %p126 = por %p124, %p125
    %p127 = scmp.ne.s32.totalorder %s118, %s119
    %p128 = scmp.eq.s32.totalorder %s19, 0
    %p129 = por %p127, %p128
    %p130 = scmp.ne.s32.totalorder %s118, %s119
    %p131 = scmp.eq.s32.totalorder %s20, 1
    %p132 = por %p130, %p131
    %p134 = scmp.ne.s32.totalorder %s119, %s133
    %p135 = scmp.eq.s32.totalorder %s20, 0
    %p136 = por %p134, %p135
    %s138 = sadd.s32 %s137, 1
    %p141 = scmp.eq.s32.totalorder %s14, 1
    %p142 = scmp.ne.s32.totalorder %s137, %s139
    %p143 = scmp.eq.s32.totalorder %s14, 0
    %p144 = por %p142, %p143
    %p145 = scmp.ne.s32.totalorder %s137, %s139
    %p146 = scmp.eq.s32.totalorder %s19, 1
    %p147 = por %p145, %p146
    %p148 = scmp.ne.s32.totalorder %s139, %s140
    %p149 = scmp.eq.s32.totalorder %s19, 0
    %p150 = por %p148, %p149
    %p151 = scmp.ne.s32.totalorder %s139, %s140
    %p152 = scmp.eq.s32.totalorder %s20, 1
    %p153 = por %p151, %p152
    %p155 = scmp.ne.s32.totalorder %s140, %s154
    %p156 = scmp.eq.s32.totalorder %s20, 0
    %p157 = por %p155, %p156
    %s158 = ssub.s32 %s14, %s21
    %p159 = scmp.eq.s32.totalorder %s158, 0
    %s161 = sadd.s32 %s160, 1
    %s162 = scalar_select %p159, %s160, %s161
    %p165 = pneg %p159
    %p166 = scmp.eq.s32.totalorder %s14, 1
    %p167 = por %p165, %p166
    %p168 = scmp.ne.s32.totalorder %s160, %s163
    %p169 = scmp.eq.s32.totalorder %s14, 0
    %p170 = por %p168, %p169
    %p171 = scmp.ne.s32.totalorder %s160, %s163
    %p172 = scmp.eq.s32.totalorder %s19, 1
    %p173 = por %p171, %p172
    %p174 = scmp.ne.s32.totalorder %s163, %s164
    %p175 = scmp.eq.s32.totalorder %s19, 0
    %p176 = por %p174, %p175
    %p177 = scmp.ne.s32.totalorder %s163, %s164
    %p178 = scmp.eq.s32.totalorder %s20, 1
    %p179 = por %p177, %p178
    %p181 = scmp.ne.s32.totalorder %s164, %s180
    %p182 = scmp.eq.s32.totalorder %s20, 0
    %p183 = por %p181, %p182
    %s184 = ssub.s32 %s14, %s21
    %p185 = scmp.eq.s32.totalorder %s184, 0
    %s187 = sadd.s32 %s186, 1
    %s188 = scalar_select %p185, %s186, %s187
    %p191 = pneg %p185
    %p192 = scmp.eq.s32.totalorder %s14, 1
    %p193 = por %p191, %p192
    %p194 = scmp.ne.s32.totalorder %s186, %s189
    %p195 = scmp.eq.s32.totalorder %s14, 0
    %p196 = por %p194, %p195
    %p197 = scmp.ne.s32.totalorder %s186, %s189
    %p198 = scmp.eq.s32.totalorder %s19, 1
    %p199 = por %p197, %p198
    %p200 = scmp.ne.s32.totalorder %s189, %s190
    %p201 = scmp.eq.s32.totalorder %s19, 0
    %p202 = por %p200, %p201
    %p203 = scmp.ne.s32.totalorder %s189, %s190
    %p204 = scmp.eq.s32.totalorder %s20, 1
    %p205 = por %p203, %p204
    %p207 = scmp.ne.s32.totalorder %s190, %s206
    %p208 = scmp.eq.s32.totalorder %s20, 0
    %p209 = por %p207, %p208
    %p210 = scmp.le.s32.totalorder 1, %s14
    %p211 = scmp.lt.s32.totalorder %s14, 3
    %p212 = pnand %p210, %p211
    %p213 = pneg %p212
    // Predicated region
    $region9: #{oct_conv_bn.3} parent=5 // pred_check
      _
    $region10: #{oct_conv_bn.3} parent=5 // pred_check_branch
      %215 = sbr.rel (%p212) target = $region12
    $region11: #{oct_conv_bn.3} parent=5 // pred_region
      %s216 = ssub.s32 %s14, 1
      // Predicated region
      $region13: #{oct_conv_bn.3} parent=11 // pred_check
        %p217 = pneg %p87
      $region14: #{oct_conv_bn.3} parent=11 // pred_check_branch
        %219 = sbr.rel (%p217) target = $region16
      $region15: #{oct_conv_bn.3} parent=11 // pred_region
        _
      $region16: #{oct_conv_bn.3} parent=11 // pred_fallthru
        _
      // Predicated region
      $region17: #{oct_conv_bn.3} parent=11 // pred_check
        %p220 = pneg %p108
      $region18: #{oct_conv_bn.3} parent=11 // pred_check_branch
        %222 = sbr.rel (%p220) target = $region20
      $region19: #{oct_conv_bn.3} parent=11 // pred_region
        _
      $region20: #{oct_conv_bn.3} parent=11 // pred_fallthru
        _
      // Predicated region
      $region21: #{oct_conv_bn.3} parent=11 // pred_check
        %p223 = pneg %p129
      $region22: #{oct_conv_bn.3} parent=11 // pred_check_branch
        %225 = sbr.rel (%p223) target = $region24
      $region23: #{oct_conv_bn.3} parent=11 // pred_region
        _
      $region24: #{oct_conv_bn.3} parent=11 // pred_fallthru
        _
      // Predicated region
      $region25: #{oct_conv_bn.3} parent=11 // pred_check
        %p226 = pneg %p150
      $region26: #{oct_conv_bn.3} parent=11 // pred_check_branch
        %228 = sbr.rel (%p226) target = $region28
      $region27: #{oct_conv_bn.3} parent=11 // pred_region
        _
      $region28: #{oct_conv_bn.3} parent=11 // pred_fallthru
        _
    $region12: #{oct_conv_bn.3} parent=5 // pred_fallthru
      _
    %p229 = scmp.lt.s32.totalorder %s14, 2
    // Predicated region
    $region29: #{oct_conv_bn.3} parent=5 // pred_check
      %p230 = pneg %p229
    $region30: #{oct_conv_bn.3} parent=5 // pred_check_branch
      %232 = sbr.rel (%p230) target = $region32
    $region31: #{oct_conv_bn.3} parent=5 // pred_region
      // Predicated region
      $region33: #{oct_conv_bn.3} parent=31 // pred_check
        %p233 = pneg %p34
      $region34: #{oct_conv_bn.3} parent=31 // pred_check_branch
        %235 = sbr.rel (%p233) target = $region36
      $region35: #{oct_conv_bn.3} parent=31 // pred_region
        %p236 = scmp.lt.s32.totalorder %s14, 1
        %s237 = scalar_select %p236, %s14, 1
        %s238 = smul.addr %s237, 2
        %s239 = smul.addr %s238, 2
        %s240 = scalar_lea.vmem %s0, %s239
      $region36: #{oct_conv_bn.3} parent=31 // pred_fallthru
        _
      // Predicated region
      $region37: #{oct_conv_bn.3} parent=31 // pred_check
        %p241 = pneg %p60
      $region38: #{oct_conv_bn.3} parent=31 // pred_check_branch
        %243 = sbr.rel (%p241) target = $region40
      $region39: #{oct_conv_bn.3} parent=31 // pred_region
        %p244 = scmp.lt.s32.totalorder %s14, 1
        %s245 = scalar_select %p244, %s14, 1
        %s246 = smul.addr %s245, 2
        %s247 = scalar_lea.vmem %s1, %s246
      $region40: #{oct_conv_bn.3} parent=31 // pred_fallthru
        _
    $region32: #{oct_conv_bn.3} parent=5 // pred_fallthru
      _
    %p248 = scmp.le.s32.totalorder 1, %s14
    %p249 = scmp.lt.s32.totalorder %s14, 3
    %p250 = pnand %p248, %p249
    %p251 = pneg %p250
    // Predicated region
    $region41: #{oct_conv_bn.3} parent=5 // pred_check
      _
    $region42: #{oct_conv_bn.3} parent=5 // pred_check_branch
      %253 = sbr.rel (%p250) target = $region44
    $region43: #{oct_conv_bn.3} parent=5 // pred_region
      %s254 = ssub.s32 %s14, 1
      %p255 = scmp.lt.s32.totalorder %s19, 1
      %s256 = scalar_select %p255, %s19, 1
      %s257 = smul.addr %s256, 2
      %s258 = smul.addr %s257, 2
      %s259 = scalar_lea.vmem %s0, %s258
      %p260 = pneg %p40
      %p261 = pneg %p37
      %p262 = scmp.lt.s32.totalorder %s19, 1
      %s263 = scalar_select %p262, %s19, 1
      %s264 = smul.addr %s263, 2
      %s265 = scalar_lea.vmem %s1, %s264
      %p266 = pneg %p66
      %p267 = pneg %p63
      %p268 = pneg %p87
      %p269 = pneg %p84
      %p270 = pneg %p108
      %p271 = pneg %p105
      %p272 = pneg %p129
      %p273 = pneg %p126
      %p274 = pneg %p150
      %p275 = pneg %p147
      %p276 = pneg %p176
      %p277 = pneg %p173
      %p278 = scmp.lt.s32.totalorder %s19, 1
      %s279 = scalar_select %p278, %s19, 1
      %s280 = smul.addr %s279, 2
      %s281 = smul.addr %s280, 4
      %s282 = scalar_lea.vmem %s6, %s281
      %p283 = pneg %p202
      %p284 = pneg %p199
      %p285 = scmp.lt.s32.totalorder %s19, 1
      %s286 = scalar_select %p285, %s19, 1
      %s287 = smul.addr %s286, 4
      %s288 = scalar_lea.vmem %s7, %s287
      %p289 = scmp.lt.s32.totalorder %s19, 1
      %s290 = scalar_select %p289, %s19, 1
      %s291 = smul.addr %s290, 2
      %s292 = smul.addr %s291, 2
      %s293 = scalar_lea.vmem %s0, %s292
      %p294 = scmp.lt.s32.totalorder %s19, 1
      %s295 = scalar_select %p294, %s19, 1
      %s296 = smul.addr %s295, 2
      %s297 = scalar_lea.vmem %s1, %s296
      %p298 = scmp.lt.s32.totalorder %s19, 1
      %s299 = scalar_select %p298, %s19, 1
      %s300 = smul.addr %s299, 2
      %s301 = smul.addr %s300, 4
      %s302 = scalar_lea.vmem %s6, %s301
      %p303 = scmp.lt.s32.totalorder %s19, 1
      %s304 = scalar_select %p303, %s19, 1
      %s305 = smul.addr %s304, 4
      %s306 = scalar_lea.vmem %s7, %s305
      %v307 = vld [vmem:[%s293] sm:$0xf]
      %v308 = vunpack.c.l.bf16 %v307
      %v309 = vld [vmem:[%s2] sm:$0xf]
      %311 = vset.pattern.permute.xlu0 0
      %312 = vperm.xlu0 %311, %v309
      %v313 = vpop.permute.xlu0 %312
      %v315 = vunpack.c.l.s4 839922192
      %v316 = vunpack.c.0.s8 %v315
      %v317 = vperm.slane %v313, %v316
      %v319 = vmul.f32 %v308, %v317
      %v320 = vld [vmem:[%s3] sm:$0xf]
      %322 = vset.pattern.permute.xlu0 0
      %323 = vperm.xlu0 %322, %v320
      %v324 = vpop.permute.xlu0 %323
      %v326 = vunpack.c.l.s4 839922192
      %v327 = vunpack.c.0.s8 %v326
      %v328 = vperm.slane %v324, %v327
      %v330 = vadd.f32 %v319, %v328
      %331 = vst [vmem:[%s302] sm:$0xff] %v330
      %v332 = vld [vmem:[%s297] sm:$0x3]
      %v333 = vunpack.c.l.bf16 %v332
      %v334 = vld [vmem:[%s4] sm:$0xf]
      %336 = vset.pattern.permute.xlu0 0
      %337 = vperm.xlu0 %336, %v334
      %v338 = vpop.permute.xlu0 %337
      %v340 = vmul.f32 %v333, %v338
      %v341 = vld [vmem:[%s5] sm:$0xf]
      %343 = vset.pattern.permute.xlu0 0
      %344 = vperm.xlu0 %343, %v341
      %v345 = vpop.permute.xlu0 %344
      %v347 = vadd.f32 %v340, %v345
      %vm348 = vcmask 519168
      %349 = vst.msk [vmem:[%s306] sm:$0xf] %vm348, %v347
      %p350 = scmp.lt.s32.totalorder %s19, 1
      %s351 = scalar_select %p350, %s19, 1
      %s352 = smul.addr %s351, 2
      %s353 = smul.addr %s352, 4
      %s354 = scalar_lea.vmem %s6, %s353
      %p355 = scmp.lt.s32.totalorder %s19, 1
      %s356 = scalar_select %p355, %s19, 1
      %s357 = smul.addr %s356, 4
      %s358 = scalar_lea.vmem %s7, %s357
      // Predicated region
      $region45: #{oct_conv_bn.3} parent=43 // pred_check
        %p359 = pneg %p173
      $region46: #{oct_conv_bn.3} parent=43 // pred_check_branch
        %361 = sbr.rel (%p359) target = $region48
      $region47: #{oct_conv_bn.3} parent=43 // pred_region
        _
      $region48: #{oct_conv_bn.3} parent=43 // pred_fallthru
        _
      // Predicated region
      $region49: #{oct_conv_bn.3} parent=43 // pred_check
        %p362 = pneg %p199
      $region50: #{oct_conv_bn.3} parent=43 // pred_check_branch
        %364 = sbr.rel (%p362) target = $region52
      $region51: #{oct_conv_bn.3} parent=43 // pred_region
        _
      $region52: #{oct_conv_bn.3} parent=43 // pred_fallthru
        _
    $region44: #{oct_conv_bn.3} parent=5 // pred_fallthru
      _
    %p365 = scmp.le.s32.totalorder 2, %s14
    // Predicated region
    $region53: #{oct_conv_bn.3} parent=5 // pred_check
      %p366 = pneg %p365
    $region54: #{oct_conv_bn.3} parent=5 // pred_check_branch
      %368 = sbr.rel (%p366) target = $region56
    $region55: #{oct_conv_bn.3} parent=5 // pred_region
      %s369 = ssub.s32 %s14, 2
      // Predicated region
      $region57: #{oct_conv_bn.3} parent=55 // pred_check
        %p370 = pneg %p179
      $region58: #{oct_conv_bn.3} parent=55 // pred_check_branch
        %372 = sbr.rel (%p370) target = $region60
      $region59: #{oct_conv_bn.3} parent=55 // pred_region
        %p373 = scmp.lt.s32.totalorder %s20, 1
        %s374 = scalar_select %p373, %s20, 1
        %s375 = smul.addr %s374, 2
        %s376 = smul.addr %s375, 4
        %s377 = scalar_lea.vmem %s6, %s376
      $region60: #{oct_conv_bn.3} parent=55 // pred_fallthru
        _
      // Predicated region
      $region61: #{oct_conv_bn.3} parent=55 // pred_check
        %p378 = pneg %p205
      $region62: #{oct_conv_bn.3} parent=55 // pred_check_branch
        %380 = sbr.rel (%p378) target = $region64
      $region63: #{oct_conv_bn.3} parent=55 // pred_region
        %p381 = scmp.lt.s32.totalorder %s20, 1
        %s382 = scalar_select %p381, %s20, 1
        %s383 = smul.addr %s382, 4
        %s384 = scalar_lea.vmem %s7, %s383
      $region64: #{oct_conv_bn.3} parent=55 // pred_fallthru
        _
    $region56: #{oct_conv_bn.3} parent=5 // pred_fallthru
      _
  $region6: #{oct_conv_bn.3} parent=0 // loop_footer
    %s18 = sadd.s32 1, %s14
  $region7: #{oct_conv_bn.3} parent=0 // loop_footer_branch
    %13 = sbr.rel target = $region3
  $region8: #{oct_conv_bn.3} parent=0 // loop_exit
    _

// kernel: oct_conv_bn.2
$region0: #{oct_conv_bn.2}
  #allocation0 [shape = 'u32[]', space=smem, size = 0x4, offset = 0x4, fixed_abs, tag = 'smem constant byte address 0x4 - core index']
  #allocation1 [shape = 'u32[72,128]{1,0:T(1,128)}', space=vmem, size = 0x9000, scoped, tag = 'internal scratch']
  %s0 = inlined_call_operand.vmem [shape: f32[2,8,256], index: 0, kind: input, shape index: {}]
  %s1 = inlined_call_operand.vmem [shape: f32[2,8,64], index: 1, kind: input, shape index: {}]
  %s2 = inlined_call_operand.vmem [shape: bf16[4,72], index: 2, kind: input, shape index: {}]
  %s3 = inlined_call_operand.vmem [shape: bf16[8,72], index: 3, kind: input, shape index: {}]
  %s4 = inlined_call_operand.vmem [shape: bf16[4,72], index: 4, kind: input, shape index: {}]
  %s5 = inlined_call_operand.vmem [shape: f32[9,256], index: 5, kind: input, shape index: {}]
  %s6 = inlined_call_operand.vmem [shape: f32[9,64], index: 6, kind: input, shape index: {}]
  %s7 = inlined_call_operand.vmem [shape: bf16[256,64], index: 7, kind: input, shape index: {}]
  %s8 = inlined_call_operand.vmem [shape: bf16[64,256], index: 8, kind: input, shape index: {}]
  %s9 = inlined_call_operand.vmem [shape: bf16[2,4,256], index: 9, kind: output, shape index: {0}]
  %s10 = inlined_call_operand.vmem [shape: bf16[2,4,64], index: 10, kind: output, shape index: {1}]
  %s11 = inlined_call_operand.vmem [shape: f32[2,4,2], index: 11, kind: output, shape index: {2}]
  %s12 = inlined_call_operand.vmem [shape: f32[2,4,2], index: 12, kind: output, shape index: {3}]
  %13 = xla_tuple %s9, %s10, %s11, %s12
  %s14 = sld [smem:[#allocation0]]
  $region93: #{oct_conv_bn.2} parent=0
    _
  %s16 = ssub.s32 1, %s14
  %s17 = scalar_select 0, %s16, %s14
  loop: start=0, step=1, limit=4
  $region2: #{oct_conv_bn.2} parent=0 // loop_pre_header
    _
  $region3: #{oct_conv_bn.2} parent=0 // loop_header
    %s19 = sphi 0, %s23
    %p20 = scmp.ge.s32.totalorder %s19, 4
    %s29 = sphi 0, %s31
    %s32 = sphi 0, %s29
    %s33 = sphi 0, %s32
    %s49 = sphi 0, %s33
    %s55 = sphi 0, %s57
    %s58 = sphi 0, %s55
    %s59 = sphi 0, %s58
    %s75 = sphi 0, %s59
    %s79 = sphi 0, %s79
    %s81 = sphi 0, %s79
    %s82 = sphi 0, %s81
    %s96 = sphi 0, %s82
    %s100 = sphi 0, %s100
    %s102 = sphi 0, %s100
    %s103 = sphi 0, %s102
    %s117 = sphi 0, %s103
    %s121 = sphi 0, %s121
    %s123 = sphi 0, %s121
    %s124 = sphi 0, %s123
    %s138 = sphi 0, %s124
    %s142 = sphi 0, %s142
    %s144 = sphi 0, %s142
    %s145 = sphi 0, %s144
    %s159 = sphi 0, %s145
    %s163 = sphi 0, %s163
    %s165 = sphi 0, %s163
    %s166 = sphi 0, %s165
    %s180 = sphi 0, %s166
    %s184 = sphi 0, %s184
    %s186 = sphi 0, %s184
    %s187 = sphi 0, %s186
    %s201 = sphi 0, %s187
    %s205 = sphi 0, %s205
    %s207 = sphi 0, %s205
    %s208 = sphi 0, %s207
    %s222 = sphi 0, %s208
    %s228 = sphi 0, %s230
    %s231 = sphi 0, %s228
    %s232 = sphi 0, %s231
    %s248 = sphi 0, %s232
    %s254 = sphi 0, %s256
    %s257 = sphi 0, %s254
    %s258 = sphi 0, %s257
    %s274 = sphi 0, %s258
    %s280 = sphi 0, %s282
    %s283 = sphi 0, %s280
    %s284 = sphi 0, %s283
    %s300 = sphi 0, %s284
    %s306 = sphi 0, %s308
    %s309 = sphi 0, %s306
    %s310 = sphi 0, %s309
    %s326 = sphi 0, %s310
  $region4: #{oct_conv_bn.2} parent=0 // loop_header_branch
    %22 = sbr.rel (%p20) target = $region8
  $region5: #{oct_conv_bn.2} parent=0 // loop_body
    %s24 = ssub.s32 %s19, 1
    %s25 = ssub.s32 %s19, 2
    %s26 = sadd.s32 %s19, 1
    %s27 = ssub.s32 %s19, %s26
    %p28 = scmp.eq.s32.totalorder %s27, 0
    %s30 = sadd.s32 %s29, 1
    %s31 = scalar_select %p28, %s29, %s30
    %p34 = pneg %p28
    %p35 = scmp.eq.s32.totalorder %s19, 1
    %p36 = por %p34, %p35
    %p37 = scmp.ne.s32.totalorder %s29, %s32
    %p38 = scmp.eq.s32.totalorder %s19, 0
    %p39 = por %p37, %p38
    %p40 = scmp.ne.s32.totalorder %s29, %s32
    %p41 = scmp.eq.s32.totalorder %s24, 1
    %p42 = por %p40, %p41
    %p43 = scmp.ne.s32.totalorder %s32, %s33
    %p44 = scmp.eq.s32.totalorder %s24, 0
    %p45 = por %p43, %p44
    %p46 = scmp.ne.s32.totalorder %s32, %s33
    %p47 = scmp.eq.s32.totalorder %s25, 1
    %p48 = por %p46, %p47
    %p50 = scmp.ne.s32.totalorder %s33, %s49
    %p51 = scmp.eq.s32.totalorder %s25, 0
    %p52 = por %p50, %p51
    %s53 = ssub.s32 %s19, %s26
    %p54 = scmp.eq.s32.totalorder %s53, 0
    %s56 = sadd.s32 %s55, 1
    %s57 = scalar_select %p54, %s55, %s56
    %p60 = pneg %p54
    %p61 = scmp.eq.s32.totalorder %s19, 1
    %p62 = por %p60, %p61
    %p63 = scmp.ne.s32.totalorder %s55, %s58
    %p64 = scmp.eq.s32.totalorder %s19, 0
    %p65 = por %p63, %p64
    %p66 = scmp.ne.s32.totalorder %s55, %s58
    %p67 = scmp.eq.s32.totalorder %s24, 1
    %p68 = por %p66, %p67
    %p69 = scmp.ne.s32.totalorder %s58, %s59
    %p70 = scmp.eq.s32.totalorder %s24, 0
    %p71 = por %p69, %p70
    %p72 = scmp.ne.s32.totalorder %s58, %s59
    %p73 = scmp.eq.s32.totalorder %s25, 1
    %p74 = por %p72, %p73
    %p76 = scmp.ne.s32.totalorder %s59, %s75
    %p77 = scmp.eq.s32.totalorder %s25, 0
    %p78 = por %p76, %p77
    %s80 = sadd.s32 %s79, 1
    %p83 = scmp.eq.s32.totalorder %s19, 1
    %p84 = scmp.ne.s32.totalorder %s79, %s81
    %p85 = scmp.eq.s32.totalorder %s19, 0
    %p86 = por %p84, %p85
    %p87 = scmp.ne.s32.totalorder %s79, %s81
    %p88 = scmp.eq.s32.totalorder %s24, 1
    %p89 = por %p87, %p88
    %p90 = scmp.ne.s32.totalorder %s81, %s82
    %p91 = scmp.eq.s32.totalorder %s24, 0
    %p92 = por %p90, %p91
    %p93 = scmp.ne.s32.totalorder %s81, %s82
    %p94 = scmp.eq.s32.totalorder %s25, 1
    %p95 = por %p93, %p94
    %p97 = scmp.ne.s32.totalorder %s82, %s96
    %p98 = scmp.eq.s32.totalorder %s25, 0
    %p99 = por %p97, %p98
    %s101 = sadd.s32 %s100, 1
    %p104 = scmp.eq.s32.totalorder %s19, 1
    %p105 = scmp.ne.s32.totalorder %s100, %s102
    %p106 = scmp.eq.s32.totalorder %s19, 0
    %p107 = por %p105, %p106
    %p108 = scmp.ne.s32.totalorder %s100, %s102
    %p109 = scmp.eq.s32.totalorder %s24, 1
    %p110 = por %p108, %p109
    %p111 = scmp.ne.s32.totalorder %s102, %s103
    %p112 = scmp.eq.s32.totalorder %s24, 0
    %p113 = por %p111, %p112
    %p114 = scmp.ne.s32.totalorder %s102, %s103
    %p115 = scmp.eq.s32.totalorder %s25, 1
    %p116 = por %p114, %p115
    %p118 = scmp.ne.s32.totalorder %s103, %s117
    %p119 = scmp.eq.s32.totalorder %s25, 0
    %p120 = por %p118, %p119
    %s122 = sadd.s32 %s121, 1
    %p125 = scmp.eq.s32.totalorder %s19, 1
    %p126 = scmp.ne.s32.totalorder %s121, %s123
    %p127 = scmp.eq.s32.totalorder %s19, 0
    %p128 = por %p126, %p127
    %p129 = scmp.ne.s32.totalorder %s121, %s123
    %p130 = scmp.eq.s32.totalorder %s24, 1
    %p131 = por %p129, %p130
    %p132 = scmp.ne.s32.totalorder %s123, %s124
    %p133 = scmp.eq.s32.totalorder %s24, 0
    %p134 = por %p132, %p133
    %p135 = scmp.ne.s32.totalorder %s123, %s124
    %p136 = scmp.eq.s32.totalorder %s25, 1
    %p137 = por %p135, %p136
    %p139 = scmp.ne.s32.totalorder %s124, %s138
    %p140 = scmp.eq.s32.totalorder %s25, 0
    %p141 = por %p139, %p140
    %s143 = sadd.s32 %s142, 1
    %p146 = scmp.eq.s32.totalorder %s19, 1
    %p147 = scmp.ne.s32.totalorder %s142, %s144
    %p148 = scmp.eq.s32.totalorder %s19, 0
    %p149 = por %p147, %p148
    %p150 = scmp.ne.s32.totalorder %s142, %s144
    %p151 = scmp.eq.s32.totalorder %s24, 1
    %p152 = por %p150, %p151
    %p153 = scmp.ne.s32.totalorder %s144, %s145
    %p154 = scmp.eq.s32.totalorder %s24, 0
    %p155 = por %p153, %p154
    %p156 = scmp.ne.s32.totalorder %s144, %s145
    %p157 = scmp.eq.s32.totalorder %s25, 1
    %p158 = por %p156, %p157
    %p160 = scmp.ne.s32.totalorder %s145, %s159
    %p161 = scmp.eq.s32.totalorder %s25, 0
    %p162 = por %p160, %p161
    %s164 = sadd.s32 %s163, 1
    %p167 = scmp.eq.s32.totalorder %s19, 1
    %p168 = scmp.ne.s32.totalorder %s163, %s165
    %p169 = scmp.eq.s32.totalorder %s19, 0
    %p170 = por %p168, %p169
    %p171 = scmp.ne.s32.totalorder %s163, %s165
    %p172 = scmp.eq.s32.totalorder %s24, 1
    %p173 = por %p171, %p172
    %p174 = scmp.ne.s32.totalorder %s165, %s166
    %p175 = scmp.eq.s32.totalorder %s24, 0
    %p176 = por %p174, %p175
    %p177 = scmp.ne.s32.totalorder %s165, %s166
    %p178 = scmp.eq.s32.totalorder %s25, 1
    %p179 = por %p177, %p178
    %p181 = scmp.ne.s32.totalorder %s166, %s180
    %p182 = scmp.eq.s32.totalorder %s25, 0
    %p183 = por %p181, %p182
    %s185 = sadd.s32 %s184, 1
    %p188 = scmp.eq.s32.totalorder %s19, 1
    %p189 = scmp.ne.s32.totalorder %s184, %s186
    %p190 = scmp.eq.s32.totalorder %s19, 0
    %p191 = por %p189, %p190
    %p192 = scmp.ne.s32.totalorder %s184, %s186
    %p193 = scmp.eq.s32.totalorder %s24, 1
    %p194 = por %p192, %p193
    %p195 = scmp.ne.s32.totalorder %s186, %s187
    %p196 = scmp.eq.s32.totalorder %s24, 0
    %p197 = por %p195, %p196
    %p198 = scmp.ne.s32.totalorder %s186, %s187
    %p199 = scmp.eq.s32.totalorder %s25, 1
    %p200 = por %p198, %p199
    %p202 = scmp.ne.s32.totalorder %s187, %s201
    %p203 = scmp.eq.s32.totalorder %s25, 0
    %p204 = por %p202, %p203
    %s206 = sadd.s32 %s205, 1
    %p209 = scmp.eq.s32.totalorder %s19, 1
    %p210 = scmp.ne.s32.totalorder %s205, %s207
    %p211 = scmp.eq.s32.totalorder %s19, 0
    %p212 = por %p210, %p211
    %p213 = scmp.ne.s32.totalorder %s205, %s207
    %p214 = scmp.eq.s32.totalorder %s24, 1
    %p215 = por %p213, %p214
    %p216 = scmp.ne.s32.totalorder %s207, %s208
    %p217 = scmp.eq.s32.totalorder %s24, 0
    %p218 = por %p216, %p217
    %p219 = scmp.ne.s32.totalorder %s207, %s208
    %p220 = scmp.eq.s32.totalorder %s25, 1
    %p221 = por %p219, %p220
    %p223 = scmp.ne.s32.totalorder %s208, %s222
    %p224 = scmp.eq.s32.totalorder %s25, 0
    %p225 = por %p223, %p224
    %s226 = ssub.s32 %s19, %s26
    %p227 = scmp.eq.s32.totalorder %s226, 0
    %s229 = sadd.s32 %s228, 1
    %s230 = scalar_select %p227, %s228, %s229
    %p233 = pneg %p227
    %p234 = scmp.eq.s32.totalorder %s19, 1
    %p235 = por %p233, %p234
    %p236 = scmp.ne.s32.totalorder %s228, %s231
    %p237 = scmp.eq.s32.totalorder %s19, 0
    %p238 = por %p236, %p237
    %p239 = scmp.ne.s32.totalorder %s228, %s231
    %p240 = scmp.eq.s32.totalorder %s24, 1
    %p241 = por %p239, %p240
    %p242 = scmp.ne.s32.totalorder %s231, %s232
    %p243 = scmp.eq.s32.totalorder %s24, 0
    %p244 = por %p242, %p243
    %p245 = scmp.ne.s32.totalorder %s231, %s232
    %p246 = scmp.eq.s32.totalorder %s25, 1
    %p247 = por %p245, %p246
    %p249 = scmp.ne.s32.totalorder %s232, %s248
    %p250 = scmp.eq.s32.totalorder %s25, 0
    %p251 = por %p249, %p250
    %s252 = ssub.s32 %s19, %s26
    %p253 = scmp.eq.s32.totalorder %s252, 0
    %s255 = sadd.s32 %s254, 1
    %s256 = scalar_select %p253, %s254, %s255
    %p259 = pneg %p253
    %p260 = scmp.eq.s32.totalorder %s19, 1
    %p261 = por %p259, %p260
    %p262 = scmp.ne.s32.totalorder %s254, %s257
    %p263 = scmp.eq.s32.totalorder %s19, 0
    %p264 = por %p262, %p263
    %p265 = scmp.ne.s32.totalorder %s254, %s257
    %p266 = scmp.eq.s32.totalorder %s24, 1
    %p267 = por %p265, %p266
    %p268 = scmp.ne.s32.totalorder %s257, %s258
    %p269 = scmp.eq.s32.totalorder %s24, 0
    %p270 = por %p268, %p269
    %p271 = scmp.ne.s32.totalorder %s257, %s258
    %p272 = scmp.eq.s32.totalorder %s25, 1
    %p273 = por %p271, %p272
    %p275 = scmp.ne.s32.totalorder %s258, %s274
    %p276 = scmp.eq.s32.totalorder %s25, 0
    %p277 = por %p275, %p276
    %s278 = ssub.s32 %s19, %s26
    %p279 = scmp.eq.s32.totalorder %s278, 0
    %s281 = sadd.s32 %s280, 1
    %s282 = scalar_select %p279, %s280, %s281
    %p285 = pneg %p279
    %p286 = scmp.eq.s32.totalorder %s19, 1
    %p287 = por %p285, %p286
    %p288 = scmp.ne.s32.totalorder %s280, %s283
    %p289 = scmp.eq.s32.totalorder %s19, 0
    %p290 = por %p288, %p289
    %p291 = scmp.ne.s32.totalorder %s280, %s283
    %p292 = scmp.eq.s32.totalorder %s24, 1
    %p293 = por %p291, %p292
    %p294 = scmp.ne.s32.totalorder %s283, %s284
    %p295 = scmp.eq.s32.totalorder %s24, 0
    %p296 = por %p294, %p295
    %p297 = scmp.ne.s32.totalorder %s283, %s284
    %p298 = scmp.eq.s32.totalorder %s25, 1
    %p299 = por %p297, %p298
    %p301 = scmp.ne.s32.totalorder %s284, %s300
    %p302 = scmp.eq.s32.totalorder %s25, 0
    %p303 = por %p301, %p302
    %s304 = ssub.s32 %s19, %s26
    %p305 = scmp.eq.s32.totalorder %s304, 0
    %s307 = sadd.s32 %s306, 1
    %s308 = scalar_select %p305, %s306, %s307
    %p311 = pneg %p305
    %p312 = scmp.eq.s32.totalorder %s19, 1
    %p313 = por %p311, %p312
    %p314 = scmp.ne.s32.totalorder %s306, %s309
    %p315 = scmp.eq.s32.totalorder %s19, 0
    %p316 = por %p314, %p315
    %p317 = scmp.ne.s32.totalorder %s306, %s309
    %p318 = scmp.eq.s32.totalorder %s24, 1
    %p319 = por %p317, %p318
    %p320 = scmp.ne.s32.totalorder %s309, %s310
    %p321 = scmp.eq.s32.totalorder %s24, 0
    %p322 = por %p320, %p321
    %p323 = scmp.ne.s32.totalorder %s309, %s310
    %p324 = scmp.eq.s32.totalorder %s25, 1
    %p325 = por %p323, %p324
    %p327 = scmp.ne.s32.totalorder %s310, %s326
    %p328 = scmp.eq.s32.totalorder %s25, 0
    %p329 = por %p327, %p328
    %p330 = scmp.le.s32.totalorder 1, %s19
    %p331 = scmp.lt.s32.totalorder %s19, 3
    %p332 = pnand %p330, %p331
    %p333 = pneg %p332
    // Predicated region
    $region9: #{oct_conv_bn.2} parent=5 // pred_check
      _
    $region10: #{oct_conv_bn.2} parent=5 // pred_check_branch
      %335 = sbr.rel (%p332) target = $region12
    $region11: #{oct_conv_bn.2} parent=5 // pred_region
      %s336 = ssub.s32 %s19, 1
      // Predicated region
      $region13: #{oct_conv_bn.2} parent=11 // pred_check
        %p337 = pneg %p92
      $region14: #{oct_conv_bn.2} parent=11 // pred_check_branch
        %339 = sbr.rel (%p337) target = $region16
      $region15: #{oct_conv_bn.2} parent=11 // pred_region
        _
      $region16: #{oct_conv_bn.2} parent=11 // pred_fallthru
        _
      // Predicated region
      $region17: #{oct_conv_bn.2} parent=11 // pred_check
        %p340 = pneg %p113
      $region18: #{oct_conv_bn.2} parent=11 // pred_check_branch
        %342 = sbr.rel (%p340) target = $region20
      $region19: #{oct_conv_bn.2} parent=11 // pred_region
        _
      $region20: #{oct_conv_bn.2} parent=11 // pred_fallthru
        _
      // Predicated region
      $region21: #{oct_conv_bn.2} parent=11 // pred_check
        %p343 = pneg %p134
      $region22: #{oct_conv_bn.2} parent=11 // pred_check_branch
        %345 = sbr.rel (%p343) target = $region24
      $region23: #{oct_conv_bn.2} parent=11 // pred_region
        _
      $region24: #{oct_conv_bn.2} parent=11 // pred_fallthru
        _
      // Predicated region
      $region25: #{oct_conv_bn.2} parent=11 // pred_check
        %p346 = pneg %p155
      $region26: #{oct_conv_bn.2} parent=11 // pred_check_branch
        %348 = sbr.rel (%p346) target = $region28
      $region27: #{oct_conv_bn.2} parent=11 // pred_region
        _
      $region28: #{oct_conv_bn.2} parent=11 // pred_fallthru
        _
      // Predicated region
      $region29: #{oct_conv_bn.2} parent=11 // pred_check
        %p349 = pneg %p176
      $region30: #{oct_conv_bn.2} parent=11 // pred_check_branch
        %351 = sbr.rel (%p349) target = $region32
      $region31: #{oct_conv_bn.2} parent=11 // pred_region
        _
      $region32: #{oct_conv_bn.2} parent=11 // pred_fallthru
        _
      // Predicated region
      $region33: #{oct_conv_bn.2} parent=11 // pred_check
        %p352 = pneg %p197
      $region34: #{oct_conv_bn.2} parent=11 // pred_check_branch
        %354 = sbr.rel (%p352) target = $region36
      $region35: #{oct_conv_bn.2} parent=11 // pred_region
        _
      $region36: #{oct_conv_bn.2} parent=11 // pred_fallthru
        _
      // Predicated region
      $region37: #{oct_conv_bn.2} parent=11 // pred_check
        %p355 = pneg %p218
      $region38: #{oct_conv_bn.2} parent=11 // pred_check_branch
        %357 = sbr.rel (%p355) target = $region40
      $region39: #{oct_conv_bn.2} parent=11 // pred_region
        _
      $region40: #{oct_conv_bn.2} parent=11 // pred_fallthru
        _
    $region12: #{oct_conv_bn.2} parent=5 // pred_fallthru
      _
    %p358 = scmp.lt.s32.totalorder %s19, 2
    // Predicated region
    $region41: #{oct_conv_bn.2} parent=5 // pred_check
      %p359 = pneg %p358
    $region42: #{oct_conv_bn.2} parent=5 // pred_check_branch
      %361 = sbr.rel (%p359) target = $region44
    $region43: #{oct_conv_bn.2} parent=5 // pred_region
      // Predicated region
      $region45: #{oct_conv_bn.2} parent=43 // pred_check
        %p362 = pneg %p39
      $region46: #{oct_conv_bn.2} parent=43 // pred_check_branch
        %364 = sbr.rel (%p362) target = $region48
      $region47: #{oct_conv_bn.2} parent=43 // pred_region
        %p365 = scmp.lt.s32.totalorder %s19, 1
        %s366 = scalar_select %p365, %s19, 1
        %s367 = smul.addr %s366, 2
        %s368 = smul.addr %s367, 8
        %s369 = scalar_lea.vmem %s0, %s368
      $region48: #{oct_conv_bn.2} parent=43 // pred_fallthru
        _
      // Predicated region
      $region49: #{oct_conv_bn.2} parent=43 // pred_check
        %p370 = pneg %p65
      $region50: #{oct_conv_bn.2} parent=43 // pred_check_branch
        %372 = sbr.rel (%p370) target = $region52
      $region51: #{oct_conv_bn.2} parent=43 // pred_region
        %p373 = scmp.lt.s32.totalorder %s19, 1
        %s374 = scalar_select %p373, %s19, 1
        %s375 = smul.addr %s374, 8
        %s376 = scalar_lea.vmem %s1, %s375
      $region52: #{oct_conv_bn.2} parent=43 // pred_fallthru
        _
    $region44: #{oct_conv_bn.2} parent=5 // pred_fallthru
      _
    %p377 = scmp.le.s32.totalorder 1, %s19
    %p378 = scmp.lt.s32.totalorder %s19, 3
    %p379 = pnand %p377, %p378
    %p380 = pneg %p379
    // Predicated region
    $region53: #{oct_conv_bn.2} parent=5 // pred_check
      _
    $region54: #{oct_conv_bn.2} parent=5 // pred_check_branch
      %382 = sbr.rel (%p379) target = $region56
    $region55: #{oct_conv_bn.2} parent=5 // pred_region
      %s383 = ssub.s32 %s19, 1
      %p384 = scmp.lt.s32.totalorder %s24, 1
      %s385 = scalar_select %p384, %s24, 1
      %s386 = smul.addr %s385, 2
      %s387 = smul.addr %s386, 8
      %s388 = scalar_lea.vmem %s0, %s387
      %p389 = pneg %p45
      %p390 = pneg %p42
      %p391 = scmp.lt.s32.totalorder %s24, 1
      %s392 = scalar_select %p391, %s24, 1
      %s393 = smul.addr %s392, 8
      %s394 = scalar_lea.vmem %s1, %s393
      %p395 = pneg %p71
      %p396 = pneg %p68
      %p397 = pneg %p92
      %p398 = pneg %p89
      %p399 = pneg %p113
      %p400 = pneg %p110
      %p401 = pneg %p134
      %p402 = pneg %p131
      %p403 = pneg %p155
      %p404 = pneg %p152
      %p405 = pneg %p176
      %p406 = pneg %p173
      %p407 = pneg %p197
      %p408 = pneg %p194
      %p409 = pneg %p218
      %p410 = pneg %p215
      %p411 = pneg %p244
      %p412 = pneg %p241
      %p413 = scmp.lt.s32.totalorder %s24, 1
      %s414 = scalar_select %p413, %s24, 1
      %s415 = smul.addr %s414, 2
      %s416 = smul.addr %s415, 2
      %s417 = scalar_lea.vmem %s9, %s416
      %p418 = pneg %p270
      %p419 = pneg %p267
      %p420 = scmp.lt.s32.totalorder %s24, 1
      %s421 = scalar_select %p420, %s24, 1
      %s422 = smul.addr %s421, 2
      %s423 = scalar_lea.vmem %s10, %s422
      %p424 = pneg %p296
      %p425 = pneg %p293
      %p426 = scmp.lt.s32.totalorder %s24, 1
      %s427 = scalar_select %p426, %s24, 1
      %s428 = smul.addr %s427, 4
      %s429 = scalar_lea.vmem %s11, %s428
      %p430 = pneg %p322
      %p431 = pneg %p319
      %p432 = scmp.lt.s32.totalorder %s24, 1
      %s433 = scalar_select %p432, %s24, 1
      %s434 = smul.addr %s433, 4
      %s435 = scalar_lea.vmem %s12, %s434
      %p436 = scmp.lt.s32.totalorder %s24, 1
      %s437 = scalar_select %p436, %s24, 1
      %s438 = smul.addr %s437, 2
      %s439 = smul.addr %s438, 8
      %s440 = scalar_lea.vmem %s0, %s439
      %p441 = scmp.lt.s32.totalorder %s24, 1
      %s442 = scalar_select %p441, %s24, 1
      %s443 = smul.addr %s442, 8
      %s444 = scalar_lea.vmem %s1, %s443
      %p445 = scmp.lt.s32.totalorder %s24, 1
      %s446 = scalar_select %p445, %s24, 1
      %s447 = smul.addr %s446, 2
      %s448 = smul.addr %s447, 2
      %s449 = scalar_lea.vmem %s9, %s448
      %p450 = scmp.lt.s32.totalorder %s24, 1
      %s451 = scalar_select %p450, %s24, 1
      %s452 = smul.addr %s451, 2
      %s453 = scalar_lea.vmem %s10, %s452
      %p454 = scmp.lt.s32.totalorder %s24, 1
      %s455 = scalar_select %p454, %s24, 1
      %s456 = smul.addr %s455, 4
      %s457 = scalar_lea.vmem %s11, %s456
      %p458 = scmp.lt.s32.totalorder %s24, 1
      %s459 = scalar_select %p458, %s24, 1
      %s460 = smul.addr %s459, 4
      %s461 = scalar_lea.vmem %s12, %s460
      %v463 = vld [vmem:[%s440] sm:$0xff]
      %v464 = vld [vmem:[%s440 + $0x8] sm:$0xff]
      %v465 = vld [vmem:[%s444] sm:$0xff]
      %v466 = vld [vmem:[%s5] sm:$0xff]
      %v467 = vld [vmem:[%s5 + $0x8] sm:$0xff]
      %v468 = vld [vmem:[%s5 + $0x10] sm:$0x1]
      %v469 = vld [vmem:[%s5 + $0x18] sm:$0x1]
      %v470 = vld [vmem:[%s6] sm:$0xff]
      %v471 = vld [vmem:[%s6 + $0x8] sm:$0x1]
      %v472 = vld [vmem:[%s2] sm:$0x3]
      %474 = vrot.lane.b32.xlu0 %v464, 17
      %v475 = vpop.permute.xlu0 %474
      %478 = vrot.lane.b32.xlu0 %v463, 17
      %v479 = vpop.permute.xlu0 %478
      %vm480 = vcmask 138240
      %v481 = vsel %vm480, %v479, %v475
      %v484 = vsel %vm480, %v475, %v479
      %v485 = vperm.slane %v466, 0
      %v486 = vperm.slane %v467, 0
      %v487 = vmul.f32 %v484, %v485
      %v488 = vmul.f32 %v481, %v486
      %489 = vrot.lane.b32.xlu0 %v464, 16
      %v490 = vpop.permute.xlu0 %489
      %492 = vrot.lane.b32.xlu0 %v463, 16
      %v493 = vpop.permute.xlu0 %492
      %vm494 = vcmask 130048
      %v495 = vsel %vm494, %v493, %v490
      %v498 = vsel %vm494, %v490, %v493
      %v499 = vperm.slane %v466, 1
      %v500 = vperm.slane %v467, 1
      %v501 = vmul.f32 %v498, %v499
      %v502 = vmul.f32 %v495, %v500
      %503 = vrot.lane.b32.xlu0 %v464, 15
      %v504 = vpop.permute.xlu0 %503
      %506 = vrot.lane.b32.xlu0 %v463, 15
      %v507 = vpop.permute.xlu0 %506
      %vm508 = vcmask 121856
      %v509 = vsel %vm508, %v507, %v504
      %v512 = vsel %vm508, %v504, %v507
      %v513 = vperm.slane %v466, 2
      %v514 = vperm.slane %v467, 2
      %v515 = vmul.f32 %v512, %v513
      %v516 = vmul.f32 %v509, %v514
      %517 = vrot.lane.b32.xlu0 %v464, 1
      %v518 = vpop.permute.xlu0 %517
      %520 = vrot.lane.b32.xlu0 %v463, 1
      %v521 = vpop.permute.xlu0 %520
      %vm522 = vcmask 7168
      %v523 = vsel %vm522, %v521, %v518
      %v526 = vsel %vm522, %v518, %v521
      %v527 = vperm.slane %v466, 3
      %v528 = vperm.slane %v467, 3
      %v529 = vmul.f32 %v526, %v527
      %v530 = vmul.f32 %v523, %v528
      %531 = vrot.lane.b32.xlu0 %v463, 127
      %v532 = vpop.permute.xlu0 %531
      %533 = vrot.lane.b32.xlu0 %v464, 127
      %v534 = vpop.permute.xlu0 %533
      %vm535 = vcmask 1039360
      %v536 = vsel %vm535, %v532, %v534
      %v540 = vsel %vm535, %v534, %v532
      %v541 = vperm.slane %v466, 5
      %v542 = vperm.slane %v467, 5
      %v543 = vmul.f32 %v536, %v541
      %v544 = vmul.f32 %v540, %v542
      %545 = vrot.lane.b32.xlu0 %v463, 113
      %v546 = vpop.permute.xlu0 %545
      %547 = vrot.lane.b32.xlu0 %v464, 113
      %v548 = vpop.permute.xlu0 %547
      %vm549 = vcmask 924672
      %v550 = vsel %vm549, %v546, %v548
      %v554 = vsel %vm549, %v548, %v546
      %v555 = vperm.slane %v466, 6
      %v556 = vperm.slane %v467, 6
      %v557 = vmul.f32 %v550, %v555
      %v558 = vmul.f32 %v554, %v556
      %559 = vrot.lane.b32.xlu0 %v463, 112
      %v560 = vpop.permute.xlu0 %559
      %561 = vrot.lane.b32.xlu0 %v464, 112
      %v562 = vpop.permute.xlu0 %561
      %vm563 = vcmask 916480
      %v564 = vsel %vm563, %v560, %v562
      %v568 = vsel %vm563, %v562, %v560
      %v569 = vperm.slane %v466, 7
      %v570 = vperm.slane %v467, 7
      %v571 = vmul.f32 %v564, %v569
      %v572 = vmul.f32 %v568, %v570
      %573 = vrot.lane.b32.xlu0 %v463, 111
      %v574 = vpop.permute.xlu0 %573
      %575 = vrot.lane.b32.xlu0 %v464, 111
      %v576 = vpop.permute.xlu0 %575
      %vm577 = vcmask 908288
      %v578 = vsel %vm577, %v574, %v576
      %v582 = vsel %vm577, %v576, %v574
      %v583 = vperm.slane %v468, 0
      %v584 = vperm.slane %v469, 0
      %v585 = vmul.f32 %v578, %v583
      %v586 = vmul.f32 %v582, %v584
      %v587 = vpack.c.bf16 %v501, %v487
      %v588 = vpack.c.bf16 %v502, %v488
      %v589 = vpack.c.bf16 %v529, %v515
      %v590 = vpack.c.bf16 %v530, %v516
      %v591 = vpack.c.bf16 %v543, %v463
      %v592 = vpack.c.bf16 %v544, %v464
      %v593 = vpack.c.bf16 %v571, %v557
      %v594 = vpack.c.bf16 %v572, %v558
      %v595 = vpack.c.bf16 %v585, %v585
      %v596 = vpack.c.bf16 %v586, %v586
      %v597 = vld [vmem:[%s3] sm:$0xf]
      %599 = vrot.lane.b32.xlu0 %v465, 73
      %v600 = vpop.permute.xlu0 %599
      %602 = vrot.lane.b32.xlu0 %v465, 9
      %v603 = vpop.permute.xlu0 %602
      %vm605 = vcmask 72704
      %v606 = vsel %vm605, %v600, %v603
      %v607 = vperm.slane %v470, 0
      %v608 = vmul.f32 %v606, %v607
      %609 = vrot.lane.b32.xlu0 %v465, 72
      %v610 = vpop.permute.xlu0 %609
      %612 = vrot.lane.b32.xlu0 %v465, 8
      %v613 = vpop.permute.xlu0 %612
      %vm615 = vcmask 64512
      %v616 = vsel %vm615, %v610, %v613
      %v617 = vperm.slane %v470, 1
      %v618 = vmul.f32 %v616, %v617
      %619 = vrot.lane.b32.xlu0 %v465, 71
      %v620 = vpop.permute.xlu0 %619
      %622 = vrot.lane.b32.xlu0 %v465, 7
      %v623 = vpop.permute.xlu0 %622
      %vm625 = vcmask 56320
      %v626 = vsel %vm625, %v620, %v623
      %v627 = vperm.slane %v470, 2
      %v628 = vmul.f32 %v626, %v627
      %629 = vrot.lane.b32.xlu0 %v465, 65
      %v630 = vpop.permute.xlu0 %629
      %632 = vrot.lane.b32.xlu0 %v465, 1
      %v633 = vpop.permute.xlu0 %632
      %v635 = vsel %vm522, %v630, %v633
      %v636 = vperm.slane %v470, 3
      %v637 = vmul.f32 %v635, %v636
      %638 = vrot.lane.b32.xlu0 %v465, 127
      %v639 = vpop.permute.xlu0 %638
      %641 = vrot.lane.b32.xlu0 %v465, 63
      %v642 = vpop.permute.xlu0 %641
      %vm644 = vcmask 515072
      %v645 = vsel %vm644, %v639, %v642
      %v646 = vperm.slane %v470, 5
      %v647 = vmul.f32 %v645, %v646
      %648 = vrot.lane.b32.xlu0 %v465, 121
      %v649 = vpop.permute.xlu0 %648
      %651 = vrot.lane.b32.xlu0 %v465, 57
      %v652 = vpop.permute.xlu0 %651
      %vm654 = vcmask 465920
      %v655 = vsel %vm654, %v649, %v652
      %v656 = vperm.slane %v470, 6
      %v657 = vmul.f32 %v655, %v656
      %658 = vrot.lane.b32.xlu0 %v465, 120
      %v659 = vpop.permute.xlu0 %658
      %661 = vrot.lane.b32.xlu0 %v465, 56
      %v662 = vpop.permute.xlu0 %661
      %vm664 = vcmask 457728
      %v665 = vsel %vm664, %v659, %v662
      %v666 = vperm.slane %v470, 7
      %v667 = vmul.f32 %v665, %v666
      %668 = vrot.lane.b32.xlu0 %v465, 119
      %v669 = vpop.permute.xlu0 %668
      %671 = vrot.lane.b32.xlu0 %v465, 55
      %v672 = vpop.permute.xlu0 %671
      %vm674 = vcmask 449536
      %v675 = vsel %vm674, %v669, %v672
      %v676 = vperm.slane %v471, 0
      %v677 = vmul.f32 %v675, %v676
      %v678 = vpack.c.bf16 %v618, %v608
      %v679 = vpack.c.bf16 %v637, %v628
      %v680 = vpack.c.bf16 %v647, %v465
      %v681 = vpack.c.bf16 %v667, %v657
      %v682 = vpack.c.bf16 %v677, %v677
      %vm683 = vcmask 588800
      %v685 = vsel %vm683, %v597, 0
      %vm687 = vcmask 1043456
      %v689 = vsel %vm687, %v682, 0
      %691 = vmatpush.bf16.msra.mxu0 0
      %692 = vmatpush.bf16.msra.mxu0 0
      %693 = vmatpush.bf16.msra.mxu0 0
      %694 = vmatpush.bf16.msra.mxu0 %v689
      %695 = vmatpush.bf16.msra.mxu0 %v681
      %696 = vmatpush.bf16.msra.mxu0 %v680
      %697 = vmatpush.bf16.msra.mxu0 %v679
      %698 = vmatpush.bf16.msra.mxu0 %v678
      %699 = vmatmul.bf16.gmra.mxu0 %v685
      %v700 = vpop.f32.mrf.mxu0
      %v701 = vadd.f32 0.0, %v700
      %v702 = vpop.f32.mrf.mxu0
      %703 = vdwg.mxu0
      %v704 = vpack.c.bf16 %v701, %v701
      %v705 = vld [vmem:[%s8] sm:$0xff]
      %v706 = vld [vmem:[%s8 + $0x8] sm:$0xff]
      %v707 = vld [vmem:[%s8 + $0x10] sm:$0xff]
      %v708 = vld [vmem:[%s8 + $0x18] sm:$0xff]
      %v709 = vld [vmem:[%s8 + $0x20] sm:$0xff]
      %v710 = vld [vmem:[%s8 + $0x28] sm:$0xff]
      %v711 = vld [vmem:[%s8 + $0x30] sm:$0xff]
      %v712 = vld [vmem:[%s8 + $0x38] sm:$0xff]
      %v721 = vunpack.c.l.b16 %v705
      %v722 = vunpack.c.h.b16 %v705
      %v723 = vunpack.c.l.b16 %v706
      %v724 = vunpack.c.h.b16 %v706
      %v725 = vunpack.c.l.b16 %v707
      %v726 = vunpack.c.h.b16 %v707
      %v727 = vunpack.c.l.b16 %v708
      %v728 = vunpack.c.h.b16 %v708
      %v729 = vunpack.c.l.b16 %v709
      %v730 = vunpack.c.h.b16 %v709
      %v731 = vunpack.c.l.b16 %v710
      %v732 = vunpack.c.h.b16 %v710
      %v733 = vunpack.c.l.b16 %v711
      %v734 = vunpack.c.h.b16 %v711
      %v735 = vunpack.c.l.b16 %v712
      %v736 = vunpack.c.h.b16 %v712
      %v737 = vpack.c.b16 %v723, %v721
      %v738 = vpack.c.b16 %v724, %v722
      %v739 = vpack.c.b16 %v727, %v725
      %v740 = vpack.c.b16 %v728, %v726
      %v741 = vpack.c.b16 %v731, %v729
      %v742 = vpack.c.b16 %v732, %v730
      %v743 = vpack.c.b16 %v735, %v733
      %v744 = vpack.c.b16 %v736, %v734
      %vm753 = vcmask 523264
      %v755 = vsel %vm753, %v704, 0
      %757 = vmatpush.bf16.msra.mxu0 0
      %758 = vmatpush.bf16.msra.mxu0 0
      %759 = vmatpush.bf16.msra.mxu0 0
      %760 = vmatpush.bf16.msra.mxu0 0
      %761 = vmatpush.bf16.msra.mxu0 %v743
      %762 = vmatpush.bf16.msra.mxu0 %v741
      %763 = vmatpush.bf16.msra.mxu0 %v739
      %764 = vmatpush.bf16.msra.mxu0 %v737
      %765 = vmatmul.bf16.gmra.mxu0 %v755
      %v766 = vpop.f32.mrf.mxu0
      %v767 = vadd.f32 0.0, %v766
      %v768 = vpop.f32.mrf.mxu0
      %769 = vdwg.mxu0
      %770 = vmatpush.bf16.msra.mxu0 0
      %771 = vmatpush.bf16.msra.mxu0 0
      %772 = vmatpush.bf16.msra.mxu0 0
      %773 = vmatpush.bf16.msra.mxu0 0
      %774 = vmatpush.bf16.msra.mxu0 %v744
      %775 = vmatpush.bf16.msra.mxu0 %v742
      %776 = vmatpush.bf16.msra.mxu0 %v740
      %777 = vmatpush.bf16.msra.mxu0 %v738
      %778 = vmatmul.bf16.gmra.mxu0 %v755
      %v779 = vpop.f32.mrf.mxu0
      %v780 = vadd.f32 0.0, %v779
      %v781 = vpop.f32.mrf.mxu0
      %782 = vdwg.mxu0
      %v784 = vsel %vm683, %v472, 0
      %v787 = vsel %vm687, %v595, 0
      %v790 = vsel %vm687, %v596, 0
      %792 = vmatpush.bf16.msra.mxu0 0
      %793 = vmatpush.bf16.msra.mxu0 0
      %794 = vmatpush.bf16.msra.mxu0 0
      %795 = vmatpush.bf16.msra.mxu0 %v787
      %796 = vmatpush.bf16.msra.mxu0 %v593
      %797 = vmatpush.bf16.msra.mxu0 %v591
      %798 = vmatpush.bf16.msra.mxu0 %v589
      %799 = vmatpush.bf16.msra.mxu0 %v587
      %800 = vmatmul.bf16.gmra.mxu0 %v784
      %v801 = vpop.f32.mrf.mxu0
      %v802 = vadd.f32 %v767, %v801
      %v803 = vpop.f32.mrf.mxu0
      %804 = vdwg.mxu0
      %805 = vmatpush.bf16.msra.mxu0 0
      %806 = vmatpush.bf16.msra.mxu0 0
      %807 = vmatpush.bf16.msra.mxu0 0
      %808 = vmatpush.bf16.msra.mxu0 %v790
      %809 = vmatpush.bf16.msra.mxu0 %v594
      %810 = vmatpush.bf16.msra.mxu0 %v592
      %811 = vmatpush.bf16.msra.mxu0 %v590
      %812 = vmatpush.bf16.msra.mxu0 %v588
      %813 = vmatmul.bf16.gmra.mxu0 %v784
      %v814 = vpop.f32.mrf.mxu0
      %v815 = vadd.f32 %v780, %v814
      %v816 = vpop.f32.mrf.mxu0
      %817 = vdwg.mxu0
      %v818 = vpack.c.bf16 %v815, %v802
      %v820 = vrot.slane %v818, 2
      %vm821 = vcmask 1041408
      %v824 = vsel %vm821, %v818, %v820
      %826 = vst [vmem:[%s449] sm:$0xf] %v824
      %v827 = vsel %vm687, %v802, 0.0
      %v828 = vsel %vm687, %v815, 0.0
      %v829 = vadd.f32 %v827, %v828
      %830 = vadd.xlane.f32.xlu0 %v829
      %v831 = vpop.xlane.xlu0 %830
      %v832 = vmul.f32 %v802, %v802
      %v833 = vmul.f32 %v815, %v815
      %v834 = vsel %vm687, %v832, 0.0
      %v835 = vsel %vm687, %v833, 0.0
      %v836 = vadd.f32 %v834, %v835
      %837 = vadd.xlane.f32.xlu0 %v836
      %v838 = vpop.xlane.xlu0 %837
      %v839 = vsel %vm522, %v831, %v838
      %vm840 = vcmask 11264
      %841 = vst.msk [vmem:[%s457] sm:$0xf] %vm840, %v839
      %v842 = vpack.c.bf16 %v463, %v463
      %v843 = vpack.c.bf16 %v464, %v464
      %v844 = vld [vmem:[%s7] sm:$0xf]
      %v845 = vld [vmem:[%s7 + $0x4] sm:$0xf]
      %v846 = vld [vmem:[%s7 + $0x8] sm:$0xf]
      %v847 = vld [vmem:[%s7 + $0xc] sm:$0xf]
      %v848 = vld [vmem:[%s7 + $0x10] sm:$0xf]
      %v849 = vld [vmem:[%s7 + $0x14] sm:$0xf]
      %v850 = vld [vmem:[%s7 + $0x18] sm:$0xf]
      %v851 = vld [vmem:[%s7 + $0x1c] sm:$0xf]
      %v852 = vld [vmem:[%s7 + $0x20] sm:$0xf]
      %v853 = vld [vmem:[%s7 + $0x24] sm:$0xf]
      %v854 = vld [vmem:[%s7 + $0x28] sm:$0xf]
      %v855 = vld [vmem:[%s7 + $0x2c] sm:$0xf]
      %v856 = vld [vmem:[%s7 + $0x30] sm:$0xf]
      %v857 = vld [vmem:[%s7 + $0x34] sm:$0xf]
      %v858 = vld [vmem:[%s7 + $0x38] sm:$0xf]
      %v859 = vld [vmem:[%s7 + $0x3c] sm:$0xf]
      %v860 = vld [vmem:[%s7 + $0x40] sm:$0xf]
      %v861 = vld [vmem:[%s7 + $0x44] sm:$0xf]
      %v862 = vld [vmem:[%s7 + $0x48] sm:$0xf]
      %v863 = vld [vmem:[%s7 + $0x4c] sm:$0xf]
      %v864 = vld [vmem:[%s7 + $0x50] sm:$0xf]
      %v865 = vld [vmem:[%s7 + $0x54] sm:$0xf]
      %v866 = vld [vmem:[%s7 + $0x58] sm:$0xf]
      %v867 = vld [vmem:[%s7 + $0x5c] sm:$0xf]
      %v868 = vld [vmem:[%s7 + $0x60] sm:$0xf]
      %v869 = vld [vmem:[%s7 + $0x64] sm:$0xf]
      %v870 = vld [vmem:[%s7 + $0x68] sm:$0xf]
      %v871 = vld [vmem:[%s7 + $0x6c] sm:$0xf]
      %v872 = vld [vmem:[%s7 + $0x70] sm:$0xf]
      %v873 = vld [vmem:[%s7 + $0x74] sm:$0xf]
      %v874 = vld [vmem:[%s7 + $0x78] sm:$0xf]
      %v875 = vld [vmem:[%s7 + $0x7c] sm:$0xf]
      %v908 = vunpack.c.l.b16 %v844
      %v909 = vunpack.c.l.b16 %v845
      %v910 = vunpack.c.l.b16 %v846
      %v911 = vunpack.c.l.b16 %v847
      %v912 = vunpack.c.l.b16 %v848
      %v913 = vunpack.c.l.b16 %v849
      %v914 = vunpack.c.l.b16 %v850
      %v915 = vunpack.c.l.b16 %v851
      %v916 = vunpack.c.l.b16 %v852
      %v917 = vunpack.c.l.b16 %v853
      %v918 = vunpack.c.l.b16 %v854
      %v919 = vunpack.c.l.b16 %v855
      %v920 = vunpack.c.l.b16 %v856
      %v921 = vunpack.c.l.b16 %v857
      %v922 = vunpack.c.l.b16 %v858
      %v923 = vunpack.c.l.b16 %v859
      %v924 = vunpack.c.l.b16 %v860
      %v925 = vunpack.c.l.b16 %v861
      %v926 = vunpack.c.l.b16 %v862
      %v927 = vunpack.c.l.b16 %v863
      %v928 = vunpack.c.l.b16 %v864
      %v929 = vunpack.c.l.b16 %v865
      %v930 = vunpack.c.l.b16 %v866
      %v931 = vunpack.c.l.b16 %v867
      %v932 = vunpack.c.l.b16 %v868
      %v933 = vunpack.c.l.b16 %v869
      %v934 = vunpack.c.l.b16 %v870
      %v935 = vunpack.c.l.b16 %v871
      %v936 = vunpack.c.l.b16 %v872
      %v937 = vunpack.c.l.b16 %v873
      %v938 = vunpack.c.l.b16 %v874
      %v939 = vunpack.c.l.b16 %v875
      %v940 = vpack.c.b16 %v909, %v908
      %v941 = vpack.c.b16 %v911, %v910
      %v942 = vpack.c.b16 %v913, %v912
      %v943 = vpack.c.b16 %v915, %v914
      %v944 = vpack.c.b16 %v917, %v916
      %v945 = vpack.c.b16 %v919, %v918
      %v946 = vpack.c.b16 %v921, %v920
      %v947 = vpack.c.b16 %v923, %v922
      %v948 = vpack.c.b16 %v925, %v924
      %v949 = vpack.c.b16 %v927, %v926
      %v950 = vpack.c.b16 %v929, %v928
      %v951 = vpack.c.b16 %v931, %v930
      %v952 = vpack.c.b16 %v933, %v932
      %v953 = vpack.c.b16 %v935, %v934
      %v954 = vpack.c.b16 %v937, %v936
      %v955 = vpack.c.b16 %v939, %v938
      %972 = vmatpush.bf16.msra.mxu0 %v947
      %973 = vmatpush.bf16.msra.mxu0 %v946
      %974 = vmatpush.bf16.msra.mxu0 %v945
      %975 = vmatpush.bf16.msra.mxu0 %v944
      %976 = vmatpush.bf16.msra.mxu0 %v943
      %977 = vmatpush.bf16.msra.mxu0 %v942
      %978 = vmatpush.bf16.msra.mxu0 %v941
      %979 = vmatpush.bf16.msra.mxu0 %v940
      %980 = vmatmul.bf16.gmra.mxu0 %v842
      %v981 = vpop.f32.mrf.mxu0
      %v982 = vadd.f32 0.0, %v981
      %v983 = vpop.f32.mrf.mxu0
      %984 = vdwg.mxu0
      %985 = vmatpush.bf16.msra.mxu0 %v955
      %986 = vmatpush.bf16.msra.mxu0 %v954
      %987 = vmatpush.bf16.msra.mxu0 %v953
      %988 = vmatpush.bf16.msra.mxu0 %v952
      %989 = vmatpush.bf16.msra.mxu0 %v951
      %990 = vmatpush.bf16.msra.mxu0 %v950
      %991 = vmatpush.bf16.msra.mxu0 %v949
      %992 = vmatpush.bf16.msra.mxu0 %v948
      %993 = vmatmul.bf16.gmra.mxu0 %v843
      %v994 = vpop.f32.mrf.mxu0
      %v995 = vadd.f32 %v982, %v994
      %v996 = vpop.f32.mrf.mxu0
      %997 = vdwg.mxu0
      %v998 = vld [vmem:[%s4] sm:$0x3]
      %1000 = vrot.lane.b32.xlu0 %v995, 73
      %v1001 = vpop.permute.xlu0 %1000
      %1003 = vrot.lane.b32.xlu0 %v995, 9
      %v1004 = vpop.permute.xlu0 %1003
      %v1006 = vsel %vm605, %v1001, %v1004
      %v1007 = vmul.f32 %v1006, %v607
      %1008 = vrot.lane.b32.xlu0 %v995, 72
      %v1009 = vpop.permute.xlu0 %1008
      %1011 = vrot.lane.b32.xlu0 %v995, 8
      %v1012 = vpop.permute.xlu0 %1011
      %v1014 = vsel %vm615, %v1009, %v1012
      %v1015 = vmul.f32 %v1014, %v617
      %1016 = vrot.lane.b32.xlu0 %v995, 71
      %v1017 = vpop.permute.xlu0 %1016
      %1019 = vrot.lane.b32.xlu0 %v995, 7
      %v1020 = vpop.permute.xlu0 %1019
      %v1022 = vsel %vm625, %v1017, %v1020
      %v1023 = vmul.f32 %v1022, %v627
      %1024 = vrot.lane.b32.xlu0 %v995, 65
      %v1025 = vpop.permute.xlu0 %1024
      %1027 = vrot.lane.b32.xlu0 %v995, 1
      %v1028 = vpop.permute.xlu0 %1027
      %v1030 = vsel %vm522, %v1025, %v1028
      %v1031 = vmul.f32 %v1030, %v636
      %1032 = vrot.lane.b32.xlu0 %v995, 127
      %v1033 = vpop.permute.xlu0 %1032
      %1035 = vrot.lane.b32.xlu0 %v995, 63
      %v1036 = vpop.permute.xlu0 %1035
      %v1038 = vsel %vm644, %v1033, %v1036
      %v1039 = vmul.f32 %v1038, %v646
      %1040 = vrot.lane.b32.xlu0 %v995, 121
      %v1041 = vpop.permute.xlu0 %1040
      %1043 = vrot.lane.b32.xlu0 %v995, 57
      %v1044 = vpop.permute.xlu0 %1043
      %v1046 = vsel %vm654, %v1041, %v1044
      %v1047 = vmul.f32 %v1046, %v656
      %1048 = vrot.lane.b32.xlu0 %v995, 120
      %v1049 = vpop.permute.xlu0 %1048
      %1051 = vrot.lane.b32.xlu0 %v995, 56
      %v1052 = vpop.permute.xlu0 %1051
      %v1054 = vsel %vm664, %v1049, %v1052
      %v1055 = vmul.f32 %v1054, %v666
      %1056 = vrot.lane.b32.xlu0 %v995, 119
      %v1057 = vpop.permute.xlu0 %1056
      %1059 = vrot.lane.b32.xlu0 %v995, 55
      %v1060 = vpop.permute.xlu0 %1059
      %v1062 = vsel %vm674, %v1057, %v1060
      %v1063 = vmul.f32 %v1062, %v676
      %v1064 = vpack.c.bf16 %v1015, %v1007
      %v1065 = vpack.c.bf16 %v1031, %v1023
      %v1066 = vpack.c.bf16 %v1039, %v995
      %v1067 = vpack.c.bf16 %v1055, %v1047
      %v1068 = vpack.c.bf16 %v1063, %v1063
      %v1070 = vrot.slane %v701, 4
      %v1073 = vsel %vm683, %v998, 0
      %v1076 = vsel %vm687, %v1068, 0
      %1078 = vmatpush.bf16.msra.mxu0 0
      %1079 = vmatpush.bf16.msra.mxu0 0
      %1080 = vmatpush.bf16.msra.mxu0 0
      %1081 = vmatpush.bf16.msra.mxu0 %v1076
      %1082 = vmatpush.bf16.msra.mxu0 %v1067
      %1083 = vmatpush.bf16.msra.mxu0 %v1066
      %1084 = vmatpush.bf16.msra.mxu0 %v1065
      %1085 = vmatpush.bf16.msra.mxu0 %v1064
      %1086 = vmatmul.bf16.gmra.mxu0 %v1073
      %v1087 = vpop.f32.mrf.mxu0
      %v1088 = vadd.f32 %v1070, %v1087
      %v1089 = vpop.f32.mrf.mxu0
      %1090 = vdwg.mxu0
      %v1091 = vpack.c.bf16 %v1088, %v1088
      %vm1092 = vcmask 517120
      %1093 = vst.msk [vmem:[%s453] sm:$0x3] %vm1092, %v1091
      %vm1094 = vcmask 519168
      %v1095 = vsel %vm1094, %v1088, 0.0
      %1096 = vadd.xlane.f32.xlu0 %v1095
      %v1097 = vpop.xlane.xlu0 %1096
      %v1098 = vmul.f32 %v1088, %v1088
      %v1099 = vsel %vm1094, %v1098, 0.0
      %1100 = vadd.xlane.f32.xlu0 %v1099
      %v1101 = vpop.xlane.xlu0 %1100
      %v1102 = vsel %vm522, %v1097, %v1101
      %1103 = vst.msk [vmem:[%s461] sm:$0xf] %vm840, %v1102
      %p1104 = scmp.lt.s32.totalorder %s24, 1
      %s1105 = scalar_select %p1104, %s24, 1
      %s1106 = smul.addr %s1105, 2
      %s1107 = smul.addr %s1106, 2
      %s1108 = scalar_lea.vmem %s9, %s1107
      %p1109 = scmp.lt.s32.totalorder %s24, 1
      %s1110 = scalar_select %p1109, %s24, 1
      %s1111 = smul.addr %s1110, 2
      %s1112 = scalar_lea.vmem %s10, %s1111
      %p1113 = scmp.lt.s32.totalorder %s24, 1
      %s1114 = scalar_select %p1113, %s24, 1
      %s1115 = smul.addr %s1114, 4
      %s1116 = scalar_lea.vmem %s11, %s1115
      %p1117 = scmp.lt.s32.totalorder %s24, 1
      %s1118 = scalar_select %p1117, %s24, 1
      %s1119 = smul.addr %s1118, 4
      %s1120 = scalar_lea.vmem %s12, %s1119
      // Predicated region
      $region57: #{oct_conv_bn.2} parent=55 // pred_check
        %p1121 = pneg %p241
      $region58: #{oct_conv_bn.2} parent=55 // pred_check_branch
        %1123 = sbr.rel (%p1121) target = $region60
      $region59: #{oct_conv_bn.2} parent=55 // pred_region
        _
      $region60: #{oct_conv_bn.2} parent=55 // pred_fallthru
        _
      // Predicated region
      $region61: #{oct_conv_bn.2} parent=55 // pred_check
        %p1124 = pneg %p267
      $region62: #{oct_conv_bn.2} parent=55 // pred_check_branch
        %1126 = sbr.rel (%p1124) target = $region64
      $region63: #{oct_conv_bn.2} parent=55 // pred_region
        _
      $region64: #{oct_conv_bn.2} parent=55 // pred_fallthru
        _
      // Predicated region
      $region65: #{oct_conv_bn.2} parent=55 // pred_check
        %p1127 = pneg %p293
      $region66: #{oct_conv_bn.2} parent=55 // pred_check_branch
        %1129 = sbr.rel (%p1127) target = $region68
      $region67: #{oct_conv_bn.2} parent=55 // pred_region
        _
      $region68: #{oct_conv_bn.2} parent=55 // pred_fallthru
        _
      // Predicated region
      $region69: #{oct_conv_bn.2} parent=55 // pred_check
        %p1130 = pneg %p319
      $region70: #{oct_conv_bn.2} parent=55 // pred_check_branch
        %1132 = sbr.rel (%p1130) target = $region72
      $region71: #{oct_conv_bn.2} parent=55 // pred_region
        _
      $region72: #{oct_conv_bn.2} parent=55 // pred_fallthru
        _
    $region56: #{oct_conv_bn.2} parent=5 // pred_fallthru
      _
    %p1133 = scmp.le.s32.totalorder 2, %s19
    // Predicated region
    $region73: #{oct_conv_bn.2} parent=5 // pred_check
      %p1134 = pneg %p1133
    $region74: #{oct_conv_bn.2} parent=5 // pred_check_branch
      %1136 = sbr.rel (%p1134) target = $region76
    $region75: #{oct_conv_bn.2} parent=5 // pred_region
      %s1137 = ssub.s32 %s19, 2
      // Predicated region
      $region77: #{oct_conv_bn.2} parent=75 // pred_check
        %p1138 = pneg %p247
      $region78: #{oct_conv_bn.2} parent=75 // pred_check_branch
        %1140 = sbr.rel (%p1138) target = $region80
      $region79: #{oct_conv_bn.2} parent=75 // pred_region
        %p1141 = scmp.lt.s32.totalorder %s25, 1
        %s1142 = scalar_select %p1141, %s25, 1
        %s1143 = smul.addr %s1142, 2
        %s1144 = smul.addr %s1143, 2
        %s1145 = scalar_lea.vmem %s9, %s1144
      $region80: #{oct_conv_bn.2} parent=75 // pred_fallthru
        _
      // Predicated region
      $region81: #{oct_conv_bn.2} parent=75 // pred_check
        %p1146 = pneg %p273
      $region82: #{oct_conv_bn.2} parent=75 // pred_check_branch
        %1148 = sbr.rel (%p1146) target = $region84
      $region83: #{oct_conv_bn.2} parent=75 // pred_region
        %p1149 = scmp.lt.s32.totalorder %s25, 1
        %s1150 = scalar_select %p1149, %s25, 1
        %s1151 = smul.addr %s1150, 2
        %s1152 = scalar_lea.vmem %s10, %s1151
      $region84: #{oct_conv_bn.2} parent=75 // pred_fallthru
        _
      // Predicated region
      $region85: #{oct_conv_bn.2} parent=75 // pred_check
        %p1153 = pneg %p299
      $region86: #{oct_conv_bn.2} parent=75 // pred_check_branch
        %1155 = sbr.rel (%p1153) target = $region88
      $region87: #{oct_conv_bn.2} parent=75 // pred_region
        %p1156 = scmp.lt.s32.totalorder %s25, 1
        %s1157 = scalar_select %p1156, %s25, 1
        %s1158 = smul.addr %s1157, 4
        %s1159 = scalar_lea.vmem %s11, %s1158
      $region88: #{oct_conv_bn.2} parent=75 // pred_fallthru
        _
      // Predicated region
      $region89: #{oct_conv_bn.2} parent=75 // pred_check
        %p1160 = pneg %p325
      $region90: #{oct_conv_bn.2} parent=75 // pred_check_branch
        %1162 = sbr.rel (%p1160) target = $region92
      $region91: #{oct_conv_bn.2} parent=75 // pred_region
        %p1163 = scmp.lt.s32.totalorder %s25, 1
        %s1164 = scalar_select %p1163, %s25, 1
        %s1165 = smul.addr %s1164, 4
        %s1166 = scalar_lea.vmem %s12, %s1165
      $region92: #{oct_conv_bn.2} parent=75 // pred_fallthru
        _
    $region76: #{oct_conv_bn.2} parent=5 // pred_fallthru
      _
  $region6: #{oct_conv_bn.2} parent=0 // loop_footer
    %s23 = sadd.s32 1, %s19
  $region7: #{oct_conv_bn.2} parent=0 // loop_footer_branch
    %18 = sbr.rel target = $region3
  $region8: #{oct_conv_bn.2} parent=0 // loop_exit
    _

</llo_original>
